<compile_context>
chip_gen: v7x
topology: tpu7x:2x2x1
jax: 0.10.0
libtpu: 0.0.40
codegen_flags: <defaults>
</compile_context>

<pallas_src>
import jax
import jax.numpy as jnp
from jax import lax
from jax.experimental import pallas as pl
from jax.experimental.pallas import tpu as pltpu

EMBEDDING_DIM = 64
N_HIDDEN = 32
NUM_CLASSES = 11          # len(codec_list)
VOCAB_SIZE = 16           # word_dict is empty in the source; synthetic small vocab
OUT_PAD = 128             # lane-dense output width


def bilstm_attention_kernel(x_ref,        # (S*B, 2E)  rows = [x_t | x_{S-1-t}], time-major
                            wih_ref,      # (2E, 8H)   block-diag fused input weights (g cols x2)
                            whh_ref,      # (2H, 8H)   block-diag fused recurrent weights (g cols x2)
                            b_ref,        # (1, 8H)    fused biases b_ih+b_hh (g cols x2)
                            wout_ref,     # (2H, 128)  lane-padded output projection
                            bout_ref,     # (1, 128)   lane-padded output bias
                            logits_ref,   # (B, 128)   output (lane-padded logits)
                            attn_ref):    # (B, 128)   output (lane-padded attention weights)
    B = logits_ref.shape[0]
    H2, G = whh_ref.shape
    H = H2 // 2
    S = x_ref.shape[0] // B
    PAD = attn_ref.shape[1]

    # ---- hoisted input projection: one 128-deep MXU matmul covers both
    #      directions and all time steps (no per-step direction select) ----
    gx = (jnp.dot(x_ref[...], wih_ref[...], preferred_element_type=jnp.float32)
          + b_ref[...])                                            # (S*B, 8H)
    gx_t = [gx[t * B:(t + 1) * B, :] for t in range(S)]            # pre-split, off serial path

    whh = whh_ref[...]

    # hoisted activation constants: tanh(x) == 2*sigmoid(2x) - 1 and the g-gate
    # columns were pre-scaled by 2 in the wrapper, so one sigmoid covers all gates.
    lane = lax.broadcasted_iota(jnp.int32, (B, G), 1)
    g_lanes = (lane >= 4 * H) & (lane < 6 * H)
    act_scale = jnp.where(g_lanes, 2.0, 1.0)
    act_off = jnp.where(g_lanes, -1.0, 0.0)

    h = jnp.zeros((B, 2 * H), jnp.float32)    # carry: [h_fwd | h_bwd]
    c = jnp.zeros((B, 2 * H), jnp.float32)    # carry: [c_fwd | c_bwd]

    # ---- fused fwd/bwd recurrence, fully unrolled (S static & small) ----
    hs = []
    for t in range(S):
        gates = gx_t[t] + jnp.dot(h, whh, preferred_element_type=jnp.float32)  # (B, 8H)
        a = jax.nn.sigmoid(gates)             # single EUP slab per step
        act = a * act_scale + act_off         # sigmoid for i/f/o lanes, tanh for g lanes
        i_g = act[:, 0 * H:2 * H]             # [i_f | i_b]
        f_g = act[:, 2 * H:4 * H]             # [f_f | f_b]
        g_g = act[:, 4 * H:6 * H]             # [g_f | g_b]
        o_g = act[:, 6 * H:8 * H]             # [o_f | o_b]
        c = f_g * c + i_g * g_g
        h = o_g * jnp.tanh(c)
        hs.append(h)

    # ---- time-aligned bidirectional outputs, kept in registers (no VMEM scratch)
    # out[s] = [fwd hidden at time s | bwd hidden at time s] via a lane-masked select.
    half = lax.broadcasted_iota(jnp.int32, (B, 2 * H), 1) < H
    outs = [jnp.where(half, hs[s], hs[S - 1 - s]) for s in range(S)]   # each (B, 2H)

    # PyTorch `final_state.view(-1, 2H, 1)` quirk: row i of `hidden` concatenates
    # flat rows 2i and 2i+1 of the stacked [h_fwd_final; h_bwd_final] states
    # (mixes batch rows for B>1; preserved on purpose for semantic parity).
    h_last = hs[S - 1]

    def _flat_row(j):
        return (h_last[j:j + 1, 0:H] if j < B
                else h_last[j - B:j - B + 1, H:2 * H])

    hidden = jnp.concatenate(
        [jnp.concatenate([_flat_row(2 * i), _flat_row(2 * i + 1)], axis=1)
         for i in range(B)], axis=0)                                   # (B, 2H)

    # attention scores, built batch-major directly (no transpose), softmax over time
    scores = jnp.concatenate(
        [jnp.sum(outs[s] * hidden, axis=-1, keepdims=True) for s in range(S)],
        axis=1)                                                        # (B, S)
    m = jnp.max(scores, axis=-1, keepdims=True)
    e = jnp.exp(scores - m)
    soft = e / jnp.sum(e, axis=-1, keepdims=True)                      # (B, S)

    # context vector and output projection
    context = outs[0] * soft[:, 0:1]
    for s in range(1, S):
        context = context + outs[s] * soft[:, s:s + 1]                 # (B, 2H)

    logits_ref[...] = (jnp.dot(context, wout_ref[...],
                               preferred_element_type=jnp.float32)
                       + bout_ref[...])                                # full-width store
    attn_ref[...] = jnp.concatenate(
        [soft, jnp.zeros((B, PAD - S), jnp.float32)], axis=1)          # full-width store


def _fuse_gate_cols(wf, wb, H):
    """Interleave per-gate columns -> [i_f|i_b | f_f|f_b | g_f|g_b | o_f|o_b]."""
    return jnp.concatenate(
        [jnp.concatenate([wf[:, g * H:(g + 1) * H], wb[:, g * H:(g + 1) * H]], axis=1)
         for g in range(4)], axis=1)


def _scale_g_cols(w, H):
    """Pre-scale the cell ('g') gate columns by 2 (sigmoid-only activation trick)."""
    lane = jnp.arange(w.shape[1])
    scale = jnp.where((lane >= 4 * H) & (lane < 6 * H), 2.0, 1.0).astype(w.dtype)
    return w * scale


def bilstm_attention_forward(X, params):
    """X: [B, S] int32 token ids. Returns (logits [B, C], attention [B, S])."""
    B, S = X.shape
    H = N_HIDDEN
    E = EMBEDDING_DIM
    C = NUM_CLASSES
    PAD = OUT_PAD

    # TODO(synk): embedding gather kept in JAX glue; at production shapes fold it
    # into the kernel via PrefetchScalarGridSpec + pl.Element row gather.
    x_sbe = jnp.take(params["embedding"], X.T, axis=0)                # (S, B, E) time-major
    # rows = [x_t | x_{S-1-t}]: 2E = 128-deep input projection, no per-step select.
    x_cat = jnp.concatenate([x_sbe, x_sbe[::-1]], axis=-1)            # (S, B, 2E)
    x2d = x_cat.reshape(S * B, 2 * E)

    zeros_e = jnp.zeros((E, 4 * H), jnp.float32)
    zeros_h = jnp.zeros((H, 4 * H), jnp.float32)
    wih_big = _fuse_gate_cols(
        jnp.concatenate([params["wih_f"], zeros_e], axis=0),          # x_t rows -> fwd lanes
        jnp.concatenate([zeros_e, params["wih_b"]], axis=0),          # x_{S-1-t} rows -> bwd lanes
        H)                                                            # (2E, 8H)
    whh_big = _fuse_gate_cols(
        jnp.concatenate([params["whh_f"], zeros_h], axis=0),          # fwd hidden rows
        jnp.concatenate([zeros_h, params["whh_b"]], axis=0),          # bwd hidden rows
        H)                                                            # (2H, 8H)
    b_big = _fuse_gate_cols(params["b_f"], params["b_b"], H)          # (1, 8H)

    wih_big = _scale_g_cols(wih_big, H)
    whh_big = _scale_g_cols(whh_big, H)
    b_big = _scale_g_cols(b_big, H)

    # lane-dense (128-wide) output projection -> unmasked vst in the kernel
    wout_pad = jnp.concatenate(
        [params["w_out"], jnp.zeros((2 * H, PAD - C), jnp.float32)], axis=1)
    bout_pad = jnp.concatenate(
        [params["b_out"], jnp.zeros((1, PAD - C), jnp.float32)], axis=1)

    vmem = pl.BlockSpec(memory_space=pltpu.MemorySpace.VMEM)

    flops = (2 * (S * B) * (2 * E) * (8 * H)      # hoisted input projection
             + 2 * S * B * (2 * H) * (8 * H)      # recurrent matmuls
             + 2 * B * (2 * H) * PAD              # output projection
             + 16 * S * B * H)                    # elementwise / attention (approx)
    transcendentals = S * B * (8 * H + 2 * H) + B * S
    bytes_accessed = 4 * (x2d.size + wih_big.size + whh_big.size + b_big.size
                          + wout_pad.size + bout_pad.size + 2 * B * PAD)

    logits_pad, attn_pad = pl.pallas_call(
        bilstm_attention_kernel,
        out_shape=(
            jax.ShapeDtypeStruct((B, PAD), jnp.float32),
            jax.ShapeDtypeStruct((B, PAD), jnp.float32),
        ),
        in_specs=[vmem] * 6,
        out_specs=(vmem, vmem),
        cost_estimate=pl.CostEstimate(
            flops=int(flops),
            transcendentals=int(transcendentals),
            bytes_accessed=int(bytes_accessed)),
    )(x2d, wih_big, whh_big, b_big, wout_pad, bout_pad)

    return logits_pad[:, :C], attn_pad[:, :S]


def init_params(key):
    E, H, C, V = EMBEDDING_DIM, N_HIDDEN, NUM_CLASSES, VOCAB_SIZE
    ks = jax.random.split(key, 9)
    s = 1.0 / jnp.sqrt(H)
    u = lambda k, shape: jax.random.uniform(k, shape, jnp.float32, -s, s)
    return {
        "embedding": jax.random.normal(ks[0], (V, E), jnp.float32),
        # weights stored pre-transposed so the kernel does x @ W (PyTorch does x @ W.T)
        "wih_f": u(ks[1], (E, 4 * H)),
        "whh_f": u(ks[2], (H, 4 * H)),
        "b_f":   u(ks[3], (1, 4 * H)),        # b_ih + b_hh combined
        "wih_b": u(ks[4], (E, 4 * H)),
        "whh_b": u(ks[5], (H, 4 * H)),
        "b_b":   u(ks[6], (1, 4 * H)),
        "w_out": u(ks[7], (2 * H, C)),
        "b_out": u(ks[8], (1, C)),
    }


if __name__ == "__main__":
    key = jax.random.PRNGKey(0)
    pkey, xkey = jax.random.split(key)
    params = init_params(pkey)

    B, S = 2, 8
    X = jax.random.randint(xkey, (B, S), 0, VOCAB_SIZE, dtype=jnp.int32)

    logits, attention = bilstm_attention_forward(X, params)
    jax.block_until_ready((logits, attention))

    assert logits.shape == (B, NUM_CLASSES)
    assert attention.shape == (B, S)
    assert bool(jnp.all(jnp.isfinite(logits))) and bool(jnp.all(jnp.isfinite(attention)))
    print("KERNEL_OK")
</pallas_src>

<mosaic_0001>
module attributes {stable_mosaic.version = 11 : i64} {
  func.func @bilstm_attention_kernel(%arg0: memref<16x128xf32, #tpu.memory_space<vmem>>, %arg1: memref<128x256xf32, #tpu.memory_space<vmem>>, %arg2: memref<64x256xf32, #tpu.memory_space<vmem>>, %arg3: memref<1x256xf32, #tpu.memory_space<vmem>>, %arg4: memref<64x128xf32, #tpu.memory_space<vmem>>, %arg5: memref<1x128xf32, #tpu.memory_space<vmem>>, %arg6: memref<2x128xf32, #tpu.memory_space<vmem>>, %arg7: memref<2x128xf32, #tpu.memory_space<vmem>>) attributes {dimension_semantics = [], scalar_prefetch = 0 : i64, scratch_operands = 0 : i64, tpu.core_type = #tpu.core_type<tc>} {
    %c0 = arith.constant 0 : index
    %c0_0 = arith.constant 0 : index
    %0 = vector.load %arg0[%c0, %c0_0] : memref<16x128xf32, #tpu.memory_space<vmem>>, vector<16x128xf32>
    %c0_1 = arith.constant 0 : index
    %c0_2 = arith.constant 0 : index
    %1 = vector.load %arg1[%c0_1, %c0_2] : memref<128x256xf32, #tpu.memory_space<vmem>>, vector<128x256xf32>
    %cst = arith.constant dense<0.000000e+00> : vector<16x256xf32>
    %2 = tpu.matmul %0, %1, %cst {dimension_numbers = #tpu.dot_dimension_numbers<[1], [0], [0], [1], [0, 0, 1, 1], [], []>} : vector<16x128xf32>, vector<128x256xf32>, vector<16x256xf32> -> vector<16x256xf32>
    %c0_3 = arith.constant 0 : index
    %c0_4 = arith.constant 0 : index
    %3 = vector.load %arg3[%c0_3, %c0_4] : memref<1x256xf32, #tpu.memory_space<vmem>>, vector<1x256xf32>
    %4 = vector.broadcast %3 : vector<1x256xf32> to vector<16x256xf32>
    %5 = arith.addf %2, %4 : vector<16x256xf32>
    %6 = vector.extract_strided_slice %5 {offsets = [0, 0], sizes = [2, 256], strides = [1, 1]} : vector<16x256xf32> to vector<2x256xf32>
    %7 = vector.extract_strided_slice %5 {offsets = [2, 0], sizes = [2, 256], strides = [1, 1]} : vector<16x256xf32> to vector<2x256xf32>
    %8 = vector.extract_strided_slice %5 {offsets = [4, 0], sizes = [2, 256], strides = [1, 1]} : vector<16x256xf32> to vector<2x256xf32>
    %9 = vector.extract_strided_slice %5 {offsets = [6, 0], sizes = [2, 256], strides = [1, 1]} : vector<16x256xf32> to vector<2x256xf32>
    %10 = vector.extract_strided_slice %5 {offsets = [8, 0], sizes = [2, 256], strides = [1, 1]} : vector<16x256xf32> to vector<2x256xf32>
    %11 = vector.extract_strided_slice %5 {offsets = [10, 0], sizes = [2, 256], strides = [1, 1]} : vector<16x256xf32> to vector<2x256xf32>
    %12 = vector.extract_strided_slice %5 {offsets = [12, 0], sizes = [2, 256], strides = [1, 1]} : vector<16x256xf32> to vector<2x256xf32>
    %13 = vector.extract_strided_slice %5 {offsets = [14, 0], sizes = [2, 256], strides = [1, 1]} : vector<16x256xf32> to vector<2x256xf32>
    %c0_5 = arith.constant 0 : index
    %c0_6 = arith.constant 0 : index
    %14 = vector.load %arg2[%c0_5, %c0_6] : memref<64x256xf32, #tpu.memory_space<vmem>>, vector<64x256xf32>
    %15 = tpu.iota {dimensions = array<i32: 1>} : vector<2x256xi32>
    %c128_i32 = arith.constant 128 : i32
    %16 = vector.broadcast %c128_i32 : i32 to vector<2x256xi32>
    %17 = arith.cmpi sge, %15, %16 : vector<2x256xi32>
    %c192_i32 = arith.constant 192 : i32
    %18 = vector.broadcast %c192_i32 : i32 to vector<2x256xi32>
    %19 = arith.cmpi slt, %15, %18 : vector<2x256xi32>
    %20 = arith.andi %17, %19 : vector<2x256xi1>
    %cst_7 = arith.constant 2.000000e+00 : f32
    %cst_8 = arith.constant 1.000000e+00 : f32
    %21 = vector.broadcast %cst_7 : f32 to vector<2x256xf32>
    %22 = vector.broadcast %cst_8 : f32 to vector<2x256xf32>
    %23 = arith.select %20, %21, %22 : vector<2x256xi1>, vector<2x256xf32>
    %cst_9 = arith.constant -1.000000e+00 : f32
    %cst_10 = arith.constant 0.000000e+00 : f32
    %24 = vector.broadcast %cst_9 : f32 to vector<2x256xf32>
    %25 = vector.broadcast %cst_10 : f32 to vector<2x256xf32>
    %26 = arith.select %20, %24, %25 : vector<2x256xi1>, vector<2x256xf32>
    %cst_11 = arith.constant 0.000000e+00 : f32
    %27 = vector.broadcast %cst_11 : f32 to vector<2x64xf32>
    %cst_12 = arith.constant 0.000000e+00 : f32
    %28 = vector.broadcast %cst_12 : f32 to vector<2x64xf32>
    %cst_13 = arith.constant dense<0.000000e+00> : vector<2x256xf32>
    %29 = tpu.matmul %27, %14, %cst_13 {dimension_numbers = #tpu.dot_dimension_numbers<[1], [0], [0], [1], [0, 0, 1, 1], [], []>} : vector<2x64xf32>, vector<64x256xf32>, vector<2x256xf32> -> vector<2x256xf32>
    %30 = arith.addf %6, %29 : vector<2x256xf32>
    %31 = arith.negf %30 : vector<2x256xf32>
    %32 = math.exp %31 : vector<2x256xf32>
    %cst_14 = arith.constant 1.000000e+00 : f32
    %33 = vector.broadcast %cst_14 : f32 to vector<2x256xf32>
    %34 = arith.addf %33, %32 : vector<2x256xf32>
    %35 = arith.divf %33, %34 : vector<2x256xf32>
    %36 = arith.mulf %35, %23 : vector<2x256xf32>
    %37 = arith.addf %36, %26 : vector<2x256xf32>
    %38 = vector.extract_strided_slice %37 {offsets = [0, 0], sizes = [2, 64], strides = [1, 1]} : vector<2x256xf32> to vector<2x64xf32>
    %39 = vector.extract_strided_slice %37 {offsets = [0, 64], sizes = [2, 64], strides = [1, 1]} : vector<2x256xf32> to vector<2x64xf32>
    %40 = vector.extract_strided_slice %37 {offsets = [0, 128], sizes = [2, 64], strides = [1, 1]} : vector<2x256xf32> to vector<2x64xf32>
    %41 = vector.extract_strided_slice %37 {offsets = [0, 192], sizes = [2, 64], strides = [1, 1]} : vector<2x256xf32> to vector<2x64xf32>
    %42 = arith.mulf %39, %28 : vector<2x64xf32>
    %43 = arith.mulf %38, %40 : vector<2x64xf32>
    %44 = arith.addf %42, %43 : vector<2x64xf32>
    %45 = math.tanh %44 : vector<2x64xf32>
    %46 = arith.mulf %41, %45 : vector<2x64xf32>
    %cst_15 = arith.constant dense<0.000000e+00> : vector<2x256xf32>
    %47 = tpu.matmul %46, %14, %cst_15 {dimension_numbers = #tpu.dot_dimension_numbers<[1], [0], [0], [1], [0, 0, 1, 1], [], []>} : vector<2x64xf32>, vector<64x256xf32>, vector<2x256xf32> -> vector<2x256xf32>
    %48 = arith.addf %7, %47 : vector<2x256xf32>
    %49 = arith.negf %48 : vector<2x256xf32>
    %50 = math.exp %49 : vector<2x256xf32>
    %cst_16 = arith.constant 1.000000e+00 : f32
    %51 = vector.broadcast %cst_16 : f32 to vector<2x256xf32>
    %52 = arith.addf %51, %50 : vector<2x256xf32>
    %53 = arith.divf %51, %52 : vector<2x256xf32>
    %54 = arith.mulf %53, %23 : vector<2x256xf32>
    %55 = arith.addf %54, %26 : vector<2x256xf32>
    %56 = vector.extract_strided_slice %55 {offsets = [0, 0], sizes = [2, 64], strides = [1, 1]} : vector<2x256xf32> to vector<2x64xf32>
    %57 = vector.extract_strided_slice %55 {offsets = [0, 64], sizes = [2, 64], strides = [1, 1]} : vector<2x256xf32> to vector<2x64xf32>
    %58 = vector.extract_strided_slice %55 {offsets = [0, 128], sizes = [2, 64], strides = [1, 1]} : vector<2x256xf32> to vector<2x64xf32>
    %59 = vector.extract_strided_slice %55 {offsets = [0, 192], sizes = [2, 64], strides = [1, 1]} : vector<2x256xf32> to vector<2x64xf32>
    %60 = arith.mulf %57, %44 : vector<2x64xf32>
    %61 = arith.mulf %56, %58 : vector<2x64xf32>
    %62 = arith.addf %60, %61 : vector<2x64xf32>
    %63 = math.tanh %62 : vector<2x64xf32>
    %64 = arith.mulf %59, %63 : vector<2x64xf32>
    %cst_17 = arith.constant dense<0.000000e+00> : vector<2x256xf32>
    %65 = tpu.matmul %64, %14, %cst_17 {dimension_numbers = #tpu.dot_dimension_numbers<[1], [0], [0], [1], [0, 0, 1, 1], [], []>} : vector<2x64xf32>, vector<64x256xf32>, vector<2x256xf32> -> vector<2x256xf32>
    %66 = arith.addf %8, %65 : vector<2x256xf32>
    %67 = arith.negf %66 : vector<2x256xf32>
    %68 = math.exp %67 : vector<2x256xf32>
    %cst_18 = arith.constant 1.000000e+00 : f32
    %69 = vector.broadcast %cst_18 : f32 to vector<2x256xf32>
    %70 = arith.addf %69, %68 : vector<2x256xf32>
    %71 = arith.divf %69, %70 : vector<2x256xf32>
    %72 = arith.mulf %71, %23 : vector<2x256xf32>
    %73 = arith.addf %72, %26 : vector<2x256xf32>
    %74 = vector.extract_strided_slice %73 {offsets = [0, 0], sizes = [2, 64], strides = [1, 1]} : vector<2x256xf32> to vector<2x64xf32>
    %75 = vector.extract_strided_slice %73 {offsets = [0, 64], sizes = [2, 64], strides = [1, 1]} : vector<2x256xf32> to vector<2x64xf32>
    %76 = vector.extract_strided_slice %73 {offsets = [0, 128], sizes = [2, 64], strides = [1, 1]} : vector<2x256xf32> to vector<2x64xf32>
    %77 = vector.extract_strided_slice %73 {offsets = [0, 192], sizes = [2, 64], strides = [1, 1]} : vector<2x256xf32> to vector<2x64xf32>
    %78 = arith.mulf %75, %62 : vector<2x64xf32>
    %79 = arith.mulf %74, %76 : vector<2x64xf32>
    %80 = arith.addf %78, %79 : vector<2x64xf32>
    %81 = math.tanh %80 : vector<2x64xf32>
    %82 = arith.mulf %77, %81 : vector<2x64xf32>
    %cst_19 = arith.constant dense<0.000000e+00> : vector<2x256xf32>
    %83 = tpu.matmul %82, %14, %cst_19 {dimension_numbers = #tpu.dot_dimension_numbers<[1], [0], [0], [1], [0, 0, 1, 1], [], []>} : vector<2x64xf32>, vector<64x256xf32>, vector<2x256xf32> -> vector<2x256xf32>
    %84 = arith.addf %9, %83 : vector<2x256xf32>
    %85 = arith.negf %84 : vector<2x256xf32>
    %86 = math.exp %85 : vector<2x256xf32>
    %cst_20 = arith.constant 1.000000e+00 : f32
    %87 = vector.broadcast %cst_20 : f32 to vector<2x256xf32>
    %88 = arith.addf %87, %86 : vector<2x256xf32>
    %89 = arith.divf %87, %88 : vector<2x256xf32>
    %90 = arith.mulf %89, %23 : vector<2x256xf32>
    %91 = arith.addf %90, %26 : vector<2x256xf32>
    %92 = vector.extract_strided_slice %91 {offsets = [0, 0], sizes = [2, 64], strides = [1, 1]} : vector<2x256xf32> to vector<2x64xf32>
    %93 = vector.extract_strided_slice %91 {offsets = [0, 64], sizes = [2, 64], strides = [1, 1]} : vector<2x256xf32> to vector<2x64xf32>
    %94 = vector.extract_strided_slice %91 {offsets = [0, 128], sizes = [2, 64], strides = [1, 1]} : vector<2x256xf32> to vector<2x64xf32>
    %95 = vector.extract_strided_slice %91 {offsets = [0, 192], sizes = [2, 64], strides = [1, 1]} : vector<2x256xf32> to vector<2x64xf32>
    %96 = arith.mulf %93, %80 : vector<2x64xf32>
    %97 = arith.mulf %92, %94 : vector<2x64xf32>
    %98 = arith.addf %96, %97 : vector<2x64xf32>
    %99 = math.tanh %98 : vector<2x64xf32>
    %100 = arith.mulf %95, %99 : vector<2x64xf32>
    %cst_21 = arith.constant dense<0.000000e+00> : vector<2x256xf32>
    %101 = tpu.matmul %100, %14, %cst_21 {dimension_numbers = #tpu.dot_dimension_numbers<[1], [0], [0], [1], [0, 0, 1, 1], [], []>} : vector<2x64xf32>, vector<64x256xf32>, vector<2x256xf32> -> vector<2x256xf32>
    %102 = arith.addf %10, %101 : vector<2x256xf32>
    %103 = arith.negf %102 : vector<2x256xf32>
    %104 = math.exp %103 : vector<2x256xf32>
    %cst_22 = arith.constant 1.000000e+00 : f32
    %105 = vector.broadcast %cst_22 : f32 to vector<2x256xf32>
    %106 = arith.addf %105, %104 : vector<2x256xf32>
    %107 = arith.divf %105, %106 : vector<2x256xf32>
    %108 = arith.mulf %107, %23 : vector<2x256xf32>
    %109 = arith.addf %108, %26 : vector<2x256xf32>
    %110 = vector.extract_strided_slice %109 {offsets = [0, 0], sizes = [2, 64], strides = [1, 1]} : vector<2x256xf32> to vector<2x64xf32>
    %111 = vector.extract_strided_slice %109 {offsets = [0, 64], sizes = [2, 64], strides = [1, 1]} : vector<2x256xf32> to vector<2x64xf32>
    %112 = vector.extract_strided_slice %109 {offsets = [0, 128], sizes = [2, 64], strides = [1, 1]} : vector<2x256xf32> to vector<2x64xf32>
    %113 = vector.extract_strided_slice %109 {offsets = [0, 192], sizes = [2, 64], strides = [1, 1]} : vector<2x256xf32> to vector<2x64xf32>
    %114 = arith.mulf %111, %98 : vector<2x64xf32>
    %115 = arith.mulf %110, %112 : vector<2x64xf32>
    %116 = arith.addf %114, %115 : vector<2x64xf32>
    %117 = math.tanh %116 : vector<2x64xf32>
    %118 = arith.mulf %113, %117 : vector<2x64xf32>
    %cst_23 = arith.constant dense<0.000000e+00> : vector<2x256xf32>
    %119 = tpu.matmul %118, %14, %cst_23 {dimension_numbers = #tpu.dot_dimension_numbers<[1], [0], [0], [1], [0, 0, 1, 1], [], []>} : vector<2x64xf32>, vector<64x256xf32>, vector<2x256xf32> -> vector<2x256xf32>
    %120 = arith.addf %11, %119 : vector<2x256xf32>
    %121 = arith.negf %120 : vector<2x256xf32>
    %122 = math.exp %121 : vector<2x256xf32>
    %cst_24 = arith.constant 1.000000e+00 : f32
    %123 = vector.broadcast %cst_24 : f32 to vector<2x256xf32>
    %124 = arith.addf %123, %122 : vector<2x256xf32>
    %125 = arith.divf %123, %124 : vector<2x256xf32>
    %126 = arith.mulf %125, %23 : vector<2x256xf32>
    %127 = arith.addf %126, %26 : vector<2x256xf32>
    %128 = vector.extract_strided_slice %127 {offsets = [0, 0], sizes = [2, 64], strides = [1, 1]} : vector<2x256xf32> to vector<2x64xf32>
    %129 = vector.extract_strided_slice %127 {offsets = [0, 64], sizes = [2, 64], strides = [1, 1]} : vector<2x256xf32> to vector<2x64xf32>
    %130 = vector.extract_strided_slice %127 {offsets = [0, 128], sizes = [2, 64], strides = [1, 1]} : vector<2x256xf32> to vector<2x64xf32>
    %131 = vector.extract_strided_slice %127 {offsets = [0, 192], sizes = [2, 64], strides = [1, 1]} : vector<2x256xf32> to vector<2x64xf32>
    %132 = arith.mulf %129, %116 : vector<2x64xf32>
    %133 = arith.mulf %128, %130 : vector<2x64xf32>
    %134 = arith.addf %132, %133 : vector<2x64xf32>
    %135 = math.tanh %134 : vector<2x64xf32>
    %136 = arith.mulf %131, %135 : vector<2x64xf32>
    %cst_25 = arith.constant dense<0.000000e+00> : vector<2x256xf32>
    %137 = tpu.matmul %136, %14, %cst_25 {dimension_numbers = #tpu.dot_dimension_numbers<[1], [0], [0], [1], [0, 0, 1, 1], [], []>} : vector<2x64xf32>, vector<64x256xf32>, vector<2x256xf32> -> vector<2x256xf32>
    %138 = arith.addf %12, %137 : vector<2x256xf32>
    %139 = arith.negf %138 : vector<2x256xf32>
    %140 = math.exp %139 : vector<2x256xf32>
    %cst_26 = arith.constant 1.000000e+00 : f32
    %141 = vector.broadcast %cst_26 : f32 to vector<2x256xf32>
    %142 = arith.addf %141, %140 : vector<2x256xf32>
    %143 = arith.divf %141, %142 : vector<2x256xf32>
    %144 = arith.mulf %143, %23 : vector<2x256xf32>
    %145 = arith.addf %144, %26 : vector<2x256xf32>
    %146 = vector.extract_strided_slice %145 {offsets = [0, 0], sizes = [2, 64], strides = [1, 1]} : vector<2x256xf32> to vector<2x64xf32>
    %147 = vector.extract_strided_slice %145 {offsets = [0, 64], sizes = [2, 64], strides = [1, 1]} : vector<2x256xf32> to vector<2x64xf32>
    %148 = vector.extract_strided_slice %145 {offsets = [0, 128], sizes = [2, 64], strides = [1, 1]} : vector<2x256xf32> to vector<2x64xf32>
    %149 = vector.extract_strided_slice %145 {offsets = [0, 192], sizes = [2, 64], strides = [1, 1]} : vector<2x256xf32> to vector<2x64xf32>
    %150 = arith.mulf %147, %134 : vector<2x64xf32>
    %151 = arith.mulf %146, %148 : vector<2x64xf32>
    %152 = arith.addf %150, %151 : vector<2x64xf32>
    %153 = math.tanh %152 : vector<2x64xf32>
    %154 = arith.mulf %149, %153 : vector<2x64xf32>
    %cst_27 = arith.constant dense<0.000000e+00> : vector<2x256xf32>
    %155 = tpu.matmul %154, %14, %cst_27 {dimension_numbers = #tpu.dot_dimension_numbers<[1], [0], [0], [1], [0, 0, 1, 1], [], []>} : vector<2x64xf32>, vector<64x256xf32>, vector<2x256xf32> -> vector<2x256xf32>
    %156 = arith.addf %13, %155 : vector<2x256xf32>
    %157 = arith.negf %156 : vector<2x256xf32>
    %158 = math.exp %157 : vector<2x256xf32>
    %cst_28 = arith.constant 1.000000e+00 : f32
    %159 = vector.broadcast %cst_28 : f32 to vector<2x256xf32>
    %160 = arith.addf %159, %158 : vector<2x256xf32>
    %161 = arith.divf %159, %160 : vector<2x256xf32>
    %162 = arith.mulf %161, %23 : vector<2x256xf32>
    %163 = arith.addf %162, %26 : vector<2x256xf32>
    %164 = vector.extract_strided_slice %163 {offsets = [0, 0], sizes = [2, 64], strides = [1, 1]} : vector<2x256xf32> to vector<2x64xf32>
    %165 = vector.extract_strided_slice %163 {offsets = [0, 64], sizes = [2, 64], strides = [1, 1]} : vector<2x256xf32> to vector<2x64xf32>
    %166 = vector.extract_strided_slice %163 {offsets = [0, 128], sizes = [2, 64], strides = [1, 1]} : vector<2x256xf32> to vector<2x64xf32>
    %167 = vector.extract_strided_slice %163 {offsets = [0, 192], sizes = [2, 64], strides = [1, 1]} : vector<2x256xf32> to vector<2x64xf32>
    %168 = arith.mulf %165, %152 : vector<2x64xf32>
    %169 = arith.mulf %164, %166 : vector<2x64xf32>
    %170 = arith.addf %168, %169 : vector<2x64xf32>
    %171 = math.tanh %170 : vector<2x64xf32>
    %172 = arith.mulf %167, %171 : vector<2x64xf32>
    %173 = tpu.iota {dimensions = array<i32: 1>} : vector<2x64xi32>
    %c32_i32 = arith.constant 32 : i32
    %174 = vector.broadcast %c32_i32 : i32 to vector<2x64xi32>
    %175 = arith.cmpi slt, %173, %174 : vector<2x64xi32>
    %176 = arith.select %175, %46, %172 : vector<2x64xi1>, vector<2x64xf32>
    %177 = arith.select %175, %64, %154 : vector<2x64xi1>, vector<2x64xf32>
    %178 = arith.select %175, %82, %136 : vector<2x64xi1>, vector<2x64xf32>
    %179 = arith.select %175, %100, %118 : vector<2x64xi1>, vector<2x64xf32>
    %180 = arith.select %175, %118, %100 : vector<2x64xi1>, vector<2x64xf32>
    %181 = arith.select %175, %136, %82 : vector<2x64xi1>, vector<2x64xf32>
    %182 = arith.select %175, %154, %64 : vector<2x64xi1>, vector<2x64xf32>
    %183 = arith.select %175, %172, %46 : vector<2x64xi1>, vector<2x64xf32>
    %184 = vector.extract_strided_slice %172 {offsets = [0, 0], sizes = [1, 32], strides = [1, 1]} : vector<2x64xf32> to vector<1x32xf32>
    %185 = vector.extract_strided_slice %172 {offsets = [1, 0], sizes = [1, 32], strides = [1, 1]} : vector<2x64xf32> to vector<1x32xf32>
    %186 = tpu.concatenate %184, %185 in 1 : vector<1x32xf32>, vector<1x32xf32> -> vector<1x64xf32>
    %187 = vector.extract_strided_slice %172 {offsets = [0, 32], sizes = [1, 32], strides = [1, 1]} : vector<2x64xf32> to vector<1x32xf32>
    %188 = vector.extract_strided_slice %172 {offsets = [1, 32], sizes = [1, 32], strides = [1, 1]} : vector<2x64xf32> to vector<1x32xf32>
    %189 = tpu.concatenate %187, %188 in 1 : vector<1x32xf32>, vector<1x32xf32> -> vector<1x64xf32>
    %190 = tpu.concatenate %186, %189 in 0 : vector<1x64xf32>, vector<1x64xf32> -> vector<2x64xf32>
    %191 = arith.mulf %176, %190 : vector<2x64xf32>
    %cst_29 = arith.constant dense<0.000000e+00> : vector<2xf32>
    %192 = vector.multi_reduction <add>, %191, %cst_29 [1] : vector<2x64xf32> to vector<2xf32>
    %193 = vector.shape_cast %192 : vector<2xf32> to vector<2x1xf32>
    %194 = arith.mulf %177, %190 : vector<2x64xf32>
    %cst_30 = arith.constant dense<0.000000e+00> : vector<2xf32>
    %195 = vector.multi_reduction <add>, %194, %cst_30 [1] : vector<2x64xf32> to vector<2xf32>
    %196 = vector.shape_cast %195 : vector<2xf32> to vector<2x1xf32>
    %197 = arith.mulf %178, %190 : vector<2x64xf32>
    %cst_31 = arith.constant dense<0.000000e+00> : vector<2xf32>
    %198 = vector.multi_reduction <add>, %197, %cst_31 [1] : vector<2x64xf32> to vector<2xf32>
    %199 = vector.shape_cast %198 : vector<2xf32> to vector<2x1xf32>
    %200 = arith.mulf %179, %190 : vector<2x64xf32>
    %cst_32 = arith.constant dense<0.000000e+00> : vector<2xf32>
    %201 = vector.multi_reduction <add>, %200, %cst_32 [1] : vector<2x64xf32> to vector<2xf32>
    %202 = vector.shape_cast %201 : vector<2xf32> to vector<2x1xf32>
    %203 = arith.mulf %180, %190 : vector<2x64xf32>
    %cst_33 = arith.constant dense<0.000000e+00> : vector<2xf32>
    %204 = vector.multi_reduction <add>, %203, %cst_33 [1] : vector<2x64xf32> to vector<2xf32>
    %205 = vector.shape_cast %204 : vector<2xf32> to vector<2x1xf32>
    %206 = arith.mulf %181, %190 : vector<2x64xf32>
    %cst_34 = arith.constant dense<0.000000e+00> : vector<2xf32>
    %207 = vector.multi_reduction <add>, %206, %cst_34 [1] : vector<2x64xf32> to vector<2xf32>
    %208 = vector.shape_cast %207 : vector<2xf32> to vector<2x1xf32>
    %209 = arith.mulf %182, %190 : vector<2x64xf32>
    %cst_35 = arith.constant dense<0.000000e+00> : vector<2xf32>
    %210 = vector.multi_reduction <add>, %209, %cst_35 [1] : vector<2x64xf32> to vector<2xf32>
    %211 = vector.shape_cast %210 : vector<2xf32> to vector<2x1xf32>
    %212 = arith.mulf %183, %190 : vector<2x64xf32>
    %cst_36 = arith.constant dense<0.000000e+00> : vector<2xf32>
    %213 = vector.multi_reduction <add>, %212, %cst_36 [1] : vector<2x64xf32> to vector<2xf32>
    %214 = vector.shape_cast %213 : vector<2xf32> to vector<2x1xf32>
    %215 = tpu.concatenate %193, %196, %199, %202, %205, %208, %211, %214 in 1 : vector<2x1xf32>, vector<2x1xf32>, vector<2x1xf32>, vector<2x1xf32>, vector<2x1xf32>, vector<2x1xf32>, vector<2x1xf32>, vector<2x1xf32> -> vector<2x8xf32>
    %cst_37 = arith.constant dense<0xFF800000> : vector<2xf32>
    %216 = vector.multi_reduction <maximumf>, %215, %cst_37 [1] : vector<2x8xf32> to vector<2xf32>
    %217 = vector.shape_cast %216 : vector<2xf32> to vector<2x1xf32>
    %218 = vector.broadcast %217 : vector<2x1xf32> to vector<2x8xf32>
    %219 = arith.subf %215, %218 : vector<2x8xf32>
    %220 = math.exp %219 : vector<2x8xf32>
    %cst_38 = arith.constant dense<0.000000e+00> : vector<2xf32>
    %221 = vector.multi_reduction <add>, %220, %cst_38 [1] : vector<2x8xf32> to vector<2xf32>
    %222 = vector.shape_cast %221 : vector<2xf32> to vector<2x1xf32>
    %223 = vector.broadcast %222 : vector<2x1xf32> to vector<2x8xf32>
    %224 = arith.divf %220, %223 : vector<2x8xf32>
    %225 = vector.extract_strided_slice %224 {offsets = [0, 0], sizes = [2, 1], strides = [1, 1]} : vector<2x8xf32> to vector<2x1xf32>
    %226 = vector.broadcast %225 : vector<2x1xf32> to vector<2x64xf32>
    %227 = arith.mulf %176, %226 : vector<2x64xf32>
    %228 = vector.extract_strided_slice %224 {offsets = [0, 1], sizes = [2, 1], strides = [1, 1]} : vector<2x8xf32> to vector<2x1xf32>
    %229 = vector.broadcast %228 : vector<2x1xf32> to vector<2x64xf32>
    %230 = arith.mulf %177, %229 : vector<2x64xf32>
    %231 = arith.addf %227, %230 : vector<2x64xf32>
    %232 = vector.extract_strided_slice %224 {offsets = [0, 2], sizes = [2, 1], strides = [1, 1]} : vector<2x8xf32> to vector<2x1xf32>
    %233 = vector.broadcast %232 : vector<2x1xf32> to vector<2x64xf32>
    %234 = arith.mulf %178, %233 : vector<2x64xf32>
    %235 = arith.addf %231, %234 : vector<2x64xf32>
    %236 = vector.extract_strided_slice %224 {offsets = [0, 3], sizes = [2, 1], strides = [1, 1]} : vector<2x8xf32> to vector<2x1xf32>
    %237 = vector.broadcast %236 : vector<2x1xf32> to vector<2x64xf32>
    %238 = arith.mulf %179, %237 : vector<2x64xf32>
    %239 = arith.addf %235, %238 : vector<2x64xf32>
    %240 = vector.extract_strided_slice %224 {offsets = [0, 4], sizes = [2, 1], strides = [1, 1]} : vector<2x8xf32> to vector<2x1xf32>
    %241 = vector.broadcast %240 : vector<2x1xf32> to vector<2x64xf32>
    %242 = arith.mulf %180, %241 : vector<2x64xf32>
    %243 = arith.addf %239, %242 : vector<2x64xf32>
    %244 = vector.extract_strided_slice %224 {offsets = [0, 5], sizes = [2, 1], strides = [1, 1]} : vector<2x8xf32> to vector<2x1xf32>
    %245 = vector.broadcast %244 : vector<2x1xf32> to vector<2x64xf32>
    %246 = arith.mulf %181, %245 : vector<2x64xf32>
    %247 = arith.addf %243, %246 : vector<2x64xf32>
    %248 = vector.extract_strided_slice %224 {offsets = [0, 6], sizes = [2, 1], strides = [1, 1]} : vector<2x8xf32> to vector<2x1xf32>
    %249 = vector.broadcast %248 : vector<2x1xf32> to vector<2x64xf32>
    %250 = arith.mulf %182, %249 : vector<2x64xf32>
    %251 = arith.addf %247, %250 : vector<2x64xf32>
    %252 = vector.extract_strided_slice %224 {offsets = [0, 7], sizes = [2, 1], strides = [1, 1]} : vector<2x8xf32> to vector<2x1xf32>
    %253 = vector.broadcast %252 : vector<2x1xf32> to vector<2x64xf32>
    %254 = arith.mulf %183, %253 : vector<2x64xf32>
    %255 = arith.addf %251, %254 : vector<2x64xf32>
    %c0_39 = arith.constant 0 : index
    %c0_40 = arith.constant 0 : index
    %256 = vector.load %arg4[%c0_39, %c0_40] : memref<64x128xf32, #tpu.memory_space<vmem>>, vector<64x128xf32>
    %cst_41 = arith.constant dense<0.000000e+00> : vector<2x128xf32>
    %257 = tpu.matmul %255, %256, %cst_41 {dimension_numbers = #tpu.dot_dimension_numbers<[1], [0], [0], [1], [0, 0, 1, 1], [], []>} : vector<2x64xf32>, vector<64x128xf32>, vector<2x128xf32> -> vector<2x128xf32>
    %c0_42 = arith.constant 0 : index
    %c0_43 = arith.constant 0 : index
    %258 = vector.load %arg5[%c0_42, %c0_43] : memref<1x128xf32, #tpu.memory_space<vmem>>, vector<1x128xf32>
    %259 = vector.broadcast %258 : vector<1x128xf32> to vector<2x128xf32>
    %260 = arith.addf %257, %259 : vector<2x128xf32>
    %c0_44 = arith.constant 0 : index
    %c0_45 = arith.constant 0 : index
    %261 = vector.load %arg6[%c0_44, %c0_45] : memref<2x128xf32, #tpu.memory_space<vmem>>, vector<2x128xf32>
    tpu.vector_store %arg6[%c0_44, %c0_45], %260 {strides = array<i32>} : memref<2x128xf32, #tpu.memory_space<vmem>>, vector<2x128xf32>,
    %cst_46 = arith.constant 0.000000e+00 : f32
    %262 = vector.broadcast %cst_46 : f32 to vector<2x120xf32>
    %263 = tpu.concatenate %224, %262 in 1 : vector<2x8xf32>, vector<2x120xf32> -> vector<2x128xf32>
    %c0_47 = arith.constant 0 : index
    %c0_48 = arith.constant 0 : index
    %264 = vector.load %arg7[%c0_47, %c0_48] : memref<2x128xf32, #tpu.memory_space<vmem>>, vector<2x128xf32>
    tpu.vector_store %arg7[%c0_47, %c0_48], %263 {strides = array<i32>} : memref<2x128xf32, #tpu.memory_space<vmem>>, vector<2x128xf32>,
    return
  }
}

</mosaic_0001>

<llo_original>
// kernel: tpu_custom_call.1
$region0: #{tpu_custom_call.1}
  #allocation0 [shape = 'u32[]', space=smem, size = 0x4, offset = 0x4, fixed_abs, tag = 'smem constant byte address 0x4 - core index']
  #allocation1 [shape = 'u32[144,128]{1,0:T(1,128)}', space=vmem, size = 0x12000, scoped, tag = 'internal scratch']
  %s0 = inlined_call_operand.hbm [shape: f32[16,128], index: 0, kind: input, shape index: {}]
  %s1 = inlined_call_operand.hbm [shape: f32[128,256], index: 1, kind: input, shape index: {}]
  %s2 = inlined_call_operand.hbm [shape: f32[64,256], index: 2, kind: input, shape index: {}]
  %s3 = inlined_call_operand.vmem [shape: f32[1,256], index: 3, kind: input, shape index: {}]
  %s4 = inlined_call_operand.hbm [shape: f32[64,128], index: 4, kind: input, shape index: {}]
  %s5 = inlined_call_operand.vmem [shape: f32[1,128], index: 5, kind: input, shape index: {}]
  %s6 = inlined_call_operand.hbm [shape: f32[2,128], index: 6, kind: output, shape index: {0}]
  %s7 = inlined_call_operand.hbm [shape: f32[2,128], index: 7, kind: output, shape index: {1}]
  %8 = xla_tuple %s6, %s7
  %s9 = sld [smem:[#allocation0]]
  $region58: #{tpu_custom_call.1} parent=0
    _
  %s11 = ssub.s32 1, %s9
  %s12 = scalar_select 0, %s11, %s9
  $region1: #{tpu_custom_call.1} parent=0
    #allocation2 [shape = 'u8[8192]{0}', space=vmem, size = 0x2000, scoped, tag = 'input window, operand 0, single buffered']
    #allocation3 [shape = 's32[1]{0}', space=sflag, size = 0x4, scoped, tag = 'scoped memory for tpu_custom_call.1']
    #allocation4 [shape = 's32[1]{0}', space=sflag, size = 0x4, scoped, tag = 'scoped memory for tpu_custom_call.1']
    #allocation5 [shape = 'u8[131072]{0}', space=vmem, size = 0x20000, scoped, tag = 'input window, operand 1, single buffered']
    #allocation6 [shape = 's32[1]{0}', space=sflag, size = 0x4, scoped, tag = 'scoped memory for tpu_custom_call.1']
    #allocation7 [shape = 'u8[65536]{0}', space=vmem, size = 0x10000, scoped, tag = 'input window, operand 2, single buffered']
    #allocation8 [shape = 'u8[32768]{0}', space=vmem, size = 0x8000, scoped, tag = 'input window, operand 4, single buffered']
    #allocation9 [shape = 's32[1]{0}', space=sflag, size = 0x4, scoped, tag = 'scoped memory for tpu_custom_call.1']
    #allocation10 [shape = 'u8[1024]{0}', space=vmem, size = 0x400, scoped, tag = 'output window, operand 0, single buffered']
    #allocation11 [shape = 'u8[1024]{0}', space=vmem, size = 0x400, scoped, tag = 'output window, operand 1, single buffered']
    #allocation12 [shape = 's32[1]{0}', space=sflag, size = 0x4, scoped, tag = 'scoped memory for tpu_custom_call.1']
    %13 = vsyncpa [#allocation3], 0
    %14 = vsyncpa [#allocation6], 0
    %15 = vsyncpa [#allocation9], 0
    %16 = vsyncpa [#allocation4], 0
    %17 = vsyncpa [#allocation12], 0
    // Predicated region
    $region2: #{tpu_custom_call.1} parent=1 // pred_check
      _
    $region3: #{tpu_custom_call.1} parent=1 // pred_check_branch
      %19 = sbr.rel (0) target = $region5
    $region4: #{tpu_custom_call.1} parent=1 // pred_region
      %s21 = ssub.s32 256, 256
      %22 = vsyncadd [#allocation3], %s21
      %s23 = sshll.u32 [#allocation2], 4
      %s24 = int_to_ptr.vmem [resolvable:$true] %s23
      %29 = dma.hbm_to_vmem [thread:$0]  %s0, 256, %s24, [#allocation3], 128, 128, 8
    $region5: #{tpu_custom_call.1} parent=1 // pred_fallthru
      _
    // Predicated region
    $region6: #{tpu_custom_call.1} parent=1 // pred_check
      _
    $region7: #{tpu_custom_call.1} parent=1 // pred_check_branch
      %31 = sbr.rel (0) target = $region9
    $region8: #{tpu_custom_call.1} parent=1 // pred_region
      %s33 = ssub.s32 4096, 4096
      %34 = vsyncadd [#allocation6], %s33
      %s35 = sshll.u32 [#allocation5], 4
      %s36 = int_to_ptr.vmem [resolvable:$true] %s35
      %41 = dma.hbm_to_vmem [thread:$0]  %s1, 4096, %s36, [#allocation6], 256, 256, 16
    $region9: #{tpu_custom_call.1} parent=1 // pred_fallthru
      _
    // Predicated region
    $region10: #{tpu_custom_call.1} parent=1 // pred_check
      _
    $region11: #{tpu_custom_call.1} parent=1 // pred_check_branch
      %43 = sbr.rel (0) target = $region13
    $region12: #{tpu_custom_call.1} parent=1 // pred_region
      %s45 = ssub.s32 2048, 2048
      %46 = vsyncadd [#allocation6], %s45
      %s47 = sshll.u32 [#allocation7], 4
      %s48 = int_to_ptr.vmem [resolvable:$true] %s47
      %53 = dma.hbm_to_vmem [thread:$0]  %s2, 2048, %s48, [#allocation6], 256, 256, 16
    $region13: #{tpu_custom_call.1} parent=1 // pred_fallthru
      _
    // Predicated region
    $region14: #{tpu_custom_call.1} parent=1 // pred_check
      _
    $region15: #{tpu_custom_call.1} parent=1 // pred_check_branch
      %55 = sbr.rel (0) target = $region17
    $region16: #{tpu_custom_call.1} parent=1 // pred_region
      _
    $region17: #{tpu_custom_call.1} parent=1 // pred_fallthru
      _
    // Predicated region
    $region18: #{tpu_custom_call.1} parent=1 // pred_check
      _
    $region19: #{tpu_custom_call.1} parent=1 // pred_check_branch
      %57 = sbr.rel (0) target = $region21
    $region20: #{tpu_custom_call.1} parent=1 // pred_region
      %s59 = ssub.s32 1024, 1024
      %60 = vsyncadd [#allocation9], %s59
      %s61 = sshll.u32 [#allocation8], 4
      %s62 = int_to_ptr.vmem [resolvable:$true] %s61
      %67 = dma.hbm_to_vmem [thread:$0]  %s4, 1024, %s62, [#allocation9], 128, 128, 8
    $region21: #{tpu_custom_call.1} parent=1 // pred_fallthru
      _
    // Predicated region
    $region22: #{tpu_custom_call.1} parent=1 // pred_check
      _
    $region23: #{tpu_custom_call.1} parent=1 // pred_check_branch
      %69 = sbr.rel (0) target = $region25
    $region24: #{tpu_custom_call.1} parent=1 // pred_region
      _
    $region25: #{tpu_custom_call.1} parent=1 // pred_fallthru
      _
    // Predicated region
    $region26: #{tpu_custom_call.1} parent=1 // pred_check
      _
    $region27: #{tpu_custom_call.1} parent=1 // pred_check_branch
      %71 = sbr.rel (0) target = $region29
    $region28: #{tpu_custom_call.1} parent=1 // pred_region
      %72 = dma.done [#allocation3], 256
    $region29: #{tpu_custom_call.1} parent=1 // pred_fallthru
      _
    // Predicated region
    $region30: #{tpu_custom_call.1} parent=1 // pred_check
      _
    $region31: #{tpu_custom_call.1} parent=1 // pred_check_branch
      %74 = sbr.rel (0) target = $region33
    $region32: #{tpu_custom_call.1} parent=1 // pred_region
      %75 = dma.done [#allocation6], 4096
    $region33: #{tpu_custom_call.1} parent=1 // pred_fallthru
      _
    // Predicated region
    $region34: #{tpu_custom_call.1} parent=1 // pred_check
      _
    $region35: #{tpu_custom_call.1} parent=1 // pred_check_branch
      %77 = sbr.rel (0) target = $region37
    $region36: #{tpu_custom_call.1} parent=1 // pred_region
      %78 = dma.done [#allocation6], 2048
    $region37: #{tpu_custom_call.1} parent=1 // pred_fallthru
      _
    // Predicated region
    $region38: #{tpu_custom_call.1} parent=1 // pred_check
      _
    $region39: #{tpu_custom_call.1} parent=1 // pred_check_branch
      %80 = sbr.rel (0) target = $region41
    $region40: #{tpu_custom_call.1} parent=1 // pred_region
      %81 = dma.done [#allocation9], 1024
    $region41: #{tpu_custom_call.1} parent=1 // pred_fallthru
      _
    %v82 = vld [vmem:[#allocation2] sm:$0xff]
    %v83 = vld [vmem:[#allocation2 + $0x8] sm:$0xff]
    %v84 = vld [vmem:[#allocation5] sm:$0xff]
    %v85 = vld [vmem:[#allocation5 + $0x8] sm:$0xff]
    %v86 = vld [vmem:[#allocation5 + $0x10] sm:$0xff]
    %v87 = vld [vmem:[#allocation5 + $0x18] sm:$0xff]
    %v88 = vld [vmem:[#allocation5 + $0x20] sm:$0xff]
    %v89 = vld [vmem:[#allocation5 + $0x28] sm:$0xff]
    %v90 = vld [vmem:[#allocation5 + $0x30] sm:$0xff]
    %v91 = vld [vmem:[#allocation5 + $0x38] sm:$0xff]
    %v92 = vld [vmem:[#allocation5 + $0x40] sm:$0xff]
    %v93 = vld [vmem:[#allocation5 + $0x48] sm:$0xff]
    %v94 = vld [vmem:[#allocation5 + $0x50] sm:$0xff]
    %v95 = vld [vmem:[#allocation5 + $0x58] sm:$0xff]
    %v96 = vld [vmem:[#allocation5 + $0x60] sm:$0xff]
    %v97 = vld [vmem:[#allocation5 + $0x68] sm:$0xff]
    %v98 = vld [vmem:[#allocation5 + $0x70] sm:$0xff]
    %v99 = vld [vmem:[#allocation5 + $0x78] sm:$0xff]
    %v100 = vld [vmem:[#allocation5 + $0x80] sm:$0xff]
    %v101 = vld [vmem:[#allocation5 + $0x88] sm:$0xff]
    %v102 = vld [vmem:[#allocation5 + $0x90] sm:$0xff]
    %v103 = vld [vmem:[#allocation5 + $0x98] sm:$0xff]
    %v104 = vld [vmem:[#allocation5 + $0xa0] sm:$0xff]
    %v105 = vld [vmem:[#allocation5 + $0xa8] sm:$0xff]
    %v106 = vld [vmem:[#allocation5 + $0xb0] sm:$0xff]
    %v107 = vld [vmem:[#allocation5 + $0xb8] sm:$0xff]
    %v108 = vld [vmem:[#allocation5 + $0xc0] sm:$0xff]
    %v109 = vld [vmem:[#allocation5 + $0xc8] sm:$0xff]
    %v110 = vld [vmem:[#allocation5 + $0xd0] sm:$0xff]
    %v111 = vld [vmem:[#allocation5 + $0xd8] sm:$0xff]
    %v112 = vld [vmem:[#allocation5 + $0xe0] sm:$0xff]
    %v113 = vld [vmem:[#allocation5 + $0xe8] sm:$0xff]
    %v114 = vld [vmem:[#allocation5 + $0xf0] sm:$0xff]
    %v115 = vld [vmem:[#allocation5 + $0xf8] sm:$0xff]
    %v116 = vld [vmem:[%s3] sm:$0x3]
    %v118 = vlaneseq
    %v119 = vshrl.u32 %v118, 7
    %v120 = vsub.s32 0, %v119
    %v121 = vrot.slane %v116, %v120
    %v122 = vlaneseq
    %v123 = vshrl.u32 %v122, 7
    %v124 = vsub.s32 1, %v123
    %v125 = vrot.slane %v116, %v124
    %128 = vmatprep.subr.mxu0 %v85
    %129 = vmatpush1.msra.mxu0 %v84
    %130 = vmatprep.subr.mxu0 %v87
    %131 = vmatpush1.msra.mxu0 %v86
    %132 = vmatprep.subr.mxu0 %v89
    %133 = vmatpush1.msra.mxu0 %v88
    %134 = vmatprep.subr.mxu0 %v91
    %135 = vmatpush1.msra.mxu0 %v90
    %136 = vmatprep.subr.mxu0 %v93
    %137 = vmatpush1.msra.mxu0 %v92
    %138 = vmatprep.subr.mxu0 %v95
    %139 = vmatpush1.msra.mxu0 %v94
    %140 = vmatprep.subr.mxu0 %v97
    %141 = vmatpush1.msra.mxu0 %v96
    %142 = vmatprep.subr.mxu0 %v99
    %143 = vmatpush1.msra.mxu0 %v98
    %144 = vmatprep.subr.mxu0 %v101
    %145 = vmatpush1.msra.mxu0 %v100
    %146 = vmatprep.subr.mxu0 %v103
    %147 = vmatpush1.msra.mxu0 %v102
    %148 = vmatprep.subr.mxu0 %v105
    %149 = vmatpush1.msra.mxu0 %v104
    %150 = vmatprep.subr.mxu0 %v107
    %151 = vmatpush1.msra.mxu0 %v106
    %152 = vmatprep.subr.mxu0 %v109
    %153 = vmatpush1.msra.mxu0 %v108
    %154 = vmatprep.subr.mxu0 %v111
    %155 = vmatpush1.msra.mxu0 %v110
    %156 = vmatprep.subr.mxu0 %v113
    %157 = vmatpush1.msra.mxu0 %v112
    %158 = vmatprep.subr.mxu0 %v115
    %159 = vmatpush1.msra.mxu0 %v114
    %160 = vmatprep.subr.mxu0 0.0
    %161 = vmatpush1.msra.mxu0 0.0
    %162 = vmatprep.subr.mxu0 0.0
    %163 = vmatpush1.msra.mxu0 0.0
    %164 = vmatprep.subr.mxu0 0.0
    %165 = vmatpush1.msra.mxu0 0.0
    %166 = vmatprep.subr.mxu0 0.0
    %167 = vmatpush1.msra.mxu0 0.0
    %168 = vmatprep.subr.mxu0 0.0
    %169 = vmatpush1.msra.mxu0 0.0
    %170 = vmatprep.subr.mxu0 0.0
    %171 = vmatpush1.msra.mxu0 0.0
    %172 = vmatprep.subr.mxu0 0.0
    %173 = vmatpush1.msra.mxu0 0.0
    %174 = vmatprep.subr.mxu0 0.0
    %175 = vmatpush1.msra.mxu0 0.0
    %176 = vmatprep.subr.mxu0 0.0
    %177 = vmatpush1.msra.mxu0 0.0
    %178 = vmatprep.subr.mxu0 0.0
    %179 = vmatpush1.msra.mxu0 0.0
    %180 = vmatprep.subr.mxu0 0.0
    %181 = vmatpush1.msra.mxu0 0.0
    %182 = vmatprep.subr.mxu0 0.0
    %183 = vmatpush1.msra.mxu0 0.0
    %184 = vmatprep.subr.mxu0 0.0
    %185 = vmatpush1.msra.mxu0 0.0
    %186 = vmatprep.subr.mxu0 0.0
    %187 = vmatpush1.msra.mxu0 0.0
    %188 = vmatprep.subr.mxu0 0.0
    %189 = vmatpush1.msra.mxu0 0.0
    %190 = vmatprep.subr.mxu0 0.0
    %191 = vmatpush1.msra.mxu0 0.0
    %192 = vmatprep.mubr.f32.mxu0 0.0
    %193 = vmatmul.mubr.f32.gmra.mrb[0].mxu0 %v82
    %v194 = vpop.f32.mrb[0].mxu0
    %v195 = vadd.f32 %v121, %v194
    %v196 = vpop.f32.mrb[0].mxu0
    %v197 = vadd.f32 %v125, %v196
    %198 = vmatprep.mubr.f32.mxu0 0.0
    %199 = vmatmul.mubr.f32.gmra.mrb[0].mxu0 %v83
    %v200 = vpop.f32.mrb[0].mxu0
    %v201 = vadd.f32 %v121, %v200
    %v202 = vpop.f32.mrb[0].mxu0
    %v203 = vadd.f32 %v125, %v202
    %204 = vdwg.mxu0
    %v205 = vld [vmem:[#allocation7] sm:$0xff]
    %v206 = vld [vmem:[#allocation7 + $0x8] sm:$0xff]
    %v207 = vld [vmem:[#allocation7 + $0x10] sm:$0xff]
    %v208 = vld [vmem:[#allocation7 + $0x18] sm:$0xff]
    %v209 = vld [vmem:[#allocation7 + $0x20] sm:$0xff]
    %v210 = vld [vmem:[#allocation7 + $0x28] sm:$0xff]
    %v211 = vld [vmem:[#allocation7 + $0x30] sm:$0xff]
    %v212 = vld [vmem:[#allocation7 + $0x38] sm:$0xff]
    %v213 = vld [vmem:[#allocation7 + $0x40] sm:$0xff]
    %v214 = vld [vmem:[#allocation7 + $0x48] sm:$0xff]
    %v215 = vld [vmem:[#allocation7 + $0x50] sm:$0xff]
    %v216 = vld [vmem:[#allocation7 + $0x58] sm:$0xff]
    %v217 = vld [vmem:[#allocation7 + $0x60] sm:$0xff]
    %v218 = vld [vmem:[#allocation7 + $0x68] sm:$0xff]
    %v219 = vld [vmem:[#allocation7 + $0x70] sm:$0xff]
    %v220 = vld [vmem:[#allocation7 + $0x78] sm:$0xff]
    %v221 = vlaneseq
    %v222 = vand.u32 %v221, 127
    %v223 = vadd.s32 %v222, 128
    %vm224 = vcmp.ge.s32.totalorder %v222, 128
    %vm225 = vcmp.ge.s32.totalorder %v223, 128
    %vm226 = vcmp.lt.s32.totalorder %v222, 192
    %vm227 = vcmp.lt.s32.totalorder %v223, 192
    %vm228 = vmand %vm224, %vm226
    %vm229 = vmand %vm225, %vm227
    %v230 = vsel %vm228, 2.0, 1.0
    %v231 = vsel %vm229, 2.0, 1.0
    %v232 = vsel %vm228, -1.0, 0.0
    %v233 = vsel %vm229, -1.0, 0.0
    %vm234 = vcmask 523264
    %v236 = vsel %vm234, 0.0, 0
    %238 = vmatprep.subr.mxu0 %v206
    %239 = vmatpush1.msra.mxu0 %v205
    %240 = vmatprep.subr.mxu0 %v208
    %241 = vmatpush1.msra.mxu0 %v207
    %242 = vmatprep.subr.mxu0 %v210
    %243 = vmatpush1.msra.mxu0 %v209
    %244 = vmatprep.subr.mxu0 %v212
    %245 = vmatpush1.msra.mxu0 %v211
    %246 = vmatprep.subr.mxu0 %v214
    %247 = vmatpush1.msra.mxu0 %v213
    %248 = vmatprep.subr.mxu0 %v216
    %249 = vmatpush1.msra.mxu0 %v215
    %250 = vmatprep.subr.mxu0 %v218
    %251 = vmatpush1.msra.mxu0 %v217
    %252 = vmatprep.subr.mxu0 %v220
    %253 = vmatpush1.msra.mxu0 %v219
    %254 = vmatprep.subr.mxu0 0.0
    %255 = vmatpush1.msra.mxu0 0.0
    %256 = vmatprep.subr.mxu0 0.0
    %257 = vmatpush1.msra.mxu0 0.0
    %258 = vmatprep.subr.mxu0 0.0
    %259 = vmatpush1.msra.mxu0 0.0
    %260 = vmatprep.subr.mxu0 0.0
    %261 = vmatpush1.msra.mxu0 0.0
    %262 = vmatprep.subr.mxu0 0.0
    %263 = vmatpush1.msra.mxu0 0.0
    %264 = vmatprep.subr.mxu0 0.0
    %265 = vmatpush1.msra.mxu0 0.0
    %266 = vmatprep.subr.mxu0 0.0
    %267 = vmatpush1.msra.mxu0 0.0
    %268 = vmatprep.subr.mxu0 0.0
    %269 = vmatpush1.msra.mxu0 0.0
    %270 = vmatprep.subr.mxu0 0.0
    %271 = vmatpush1.msra.mxu0 0.0
    %272 = vmatprep.subr.mxu0 0.0
    %273 = vmatpush1.msra.mxu0 0.0
    %274 = vmatprep.subr.mxu0 0.0
    %275 = vmatpush1.msra.mxu0 0.0
    %276 = vmatprep.subr.mxu0 0.0
    %277 = vmatpush1.msra.mxu0 0.0
    %278 = vmatprep.subr.mxu0 0.0
    %279 = vmatpush1.msra.mxu0 0.0
    %280 = vmatprep.subr.mxu0 0.0
    %281 = vmatpush1.msra.mxu0 0.0
    %282 = vmatprep.subr.mxu0 0.0
    %283 = vmatpush1.msra.mxu0 0.0
    %284 = vmatprep.subr.mxu0 0.0
    %285 = vmatpush1.msra.mxu0 0.0
    %286 = vmatprep.subr.mxu0 0.0
    %287 = vmatpush1.msra.mxu0 0.0
    %288 = vmatprep.subr.mxu0 0.0
    %289 = vmatpush1.msra.mxu0 0.0
    %290 = vmatprep.subr.mxu0 0.0
    %291 = vmatpush1.msra.mxu0 0.0
    %292 = vmatprep.subr.mxu0 0.0
    %293 = vmatpush1.msra.mxu0 0.0
    %294 = vmatprep.subr.mxu0 0.0
    %295 = vmatpush1.msra.mxu0 0.0
    %296 = vmatprep.subr.mxu0 0.0
    %297 = vmatpush1.msra.mxu0 0.0
    %298 = vmatprep.subr.mxu0 0.0
    %299 = vmatpush1.msra.mxu0 0.0
    %300 = vmatprep.subr.mxu0 0.0
    %301 = vmatpush1.msra.mxu0 0.0
    %302 = vmatprep.mubr.f32.mxu0 0.0
    %303 = vmatmul.mubr.f32.gmra.mrb[0].mxu0 %v236
    %v304 = vpop.f32.mrb[0].mxu0
    %v305 = vadd.f32 0.0, %v304
    %v306 = vpop.f32.mrb[0].mxu0
    %v307 = vadd.f32 0.0, %v306
    %308 = vdwg.mxu0
    %v309 = vadd.f32 %v195, %v305
    %v310 = vadd.f32 %v197, %v307
    %v311 = vxor.u32 %v309, 2147483648
    %v312 = vxor.u32 %v310, 2147483648
    %v313 = vmul.f32 %v311, 1.442695
    %v314 = vpow.pop %v313
    %v315 = vmul.f32 %v312, 1.442695
    %v316 = vpow.pop %v315
    %v317 = vadd.f32 %v314, 1.0
    %v318 = vadd.f32 %v316, 1.0
    %v319 = vrcp.pop %v317
    %v320 = vmul.f32 1.0, %v319
    %v321 = vrcp.pop %v318
    %v322 = vmul.f32 1.0, %v321
    %v323 = vmul.f32 %v320, %v230
    %v324 = vmul.f32 %v322, %v231
    %v325 = vadd.f32 %v323, %v232
    %v326 = vadd.f32 %v324, %v233
    %v327 = vmul.f32 %v325, 0.0
    %v328 = vmul.f32 %v325, %v326
    %330 = vrot.lane.b32.xlu0 %v328, 64
    %v331 = vpop.permute.xlu0 %330
    %v333 = vadd.f32 %v327, %v331
    %v334 = vtanh.pop %v333
    %v335 = vmul.f32 %v326, %v334
    %337 = vrot.lane.b32.xlu0 %v335, 64
    %v338 = vpop.permute.xlu0 %337
    %v339 = vsel %vm234, %v338, 0
    %341 = vmatprep.subr.mxu0 %v206
    %342 = vmatpush1.msra.mxu0 %v205
    %343 = vmatprep.subr.mxu0 %v208
    %344 = vmatpush1.msra.mxu0 %v207
    %345 = vmatprep.subr.mxu0 %v210
    %346 = vmatpush1.msra.mxu0 %v209
    %347 = vmatprep.subr.mxu0 %v212
    %348 = vmatpush1.msra.mxu0 %v211
    %349 = vmatprep.subr.mxu0 %v214
    %350 = vmatpush1.msra.mxu0 %v213
    %351 = vmatprep.subr.mxu0 %v216
    %352 = vmatpush1.msra.mxu0 %v215
    %353 = vmatprep.subr.mxu0 %v218
    %354 = vmatpush1.msra.mxu0 %v217
    %355 = vmatprep.subr.mxu0 %v220
    %356 = vmatpush1.msra.mxu0 %v219
    %357 = vmatprep.subr.mxu0 0.0
    %358 = vmatpush1.msra.mxu0 0.0
    %359 = vmatprep.subr.mxu0 0.0
    %360 = vmatpush1.msra.mxu0 0.0
    %361 = vmatprep.subr.mxu0 0.0
    %362 = vmatpush1.msra.mxu0 0.0
    %363 = vmatprep.subr.mxu0 0.0
    %364 = vmatpush1.msra.mxu0 0.0
    %365 = vmatprep.subr.mxu0 0.0
    %366 = vmatpush1.msra.mxu0 0.0
    %367 = vmatprep.subr.mxu0 0.0
    %368 = vmatpush1.msra.mxu0 0.0
    %369 = vmatprep.subr.mxu0 0.0
    %370 = vmatpush1.msra.mxu0 0.0
    %371 = vmatprep.subr.mxu0 0.0
    %372 = vmatpush1.msra.mxu0 0.0
    %373 = vmatprep.subr.mxu0 0.0
    %374 = vmatpush1.msra.mxu0 0.0
    %375 = vmatprep.subr.mxu0 0.0
    %376 = vmatpush1.msra.mxu0 0.0
    %377 = vmatprep.subr.mxu0 0.0
    %378 = vmatpush1.msra.mxu0 0.0
    %379 = vmatprep.subr.mxu0 0.0
    %380 = vmatpush1.msra.mxu0 0.0
    %381 = vmatprep.subr.mxu0 0.0
    %382 = vmatpush1.msra.mxu0 0.0
    %383 = vmatprep.subr.mxu0 0.0
    %384 = vmatpush1.msra.mxu0 0.0
    %385 = vmatprep.subr.mxu0 0.0
    %386 = vmatpush1.msra.mxu0 0.0
    %387 = vmatprep.subr.mxu0 0.0
    %388 = vmatpush1.msra.mxu0 0.0
    %389 = vmatprep.subr.mxu0 0.0
    %390 = vmatpush1.msra.mxu0 0.0
    %391 = vmatprep.subr.mxu0 0.0
    %392 = vmatpush1.msra.mxu0 0.0
    %393 = vmatprep.subr.mxu0 0.0
    %394 = vmatpush1.msra.mxu0 0.0
    %395 = vmatprep.subr.mxu0 0.0
    %396 = vmatpush1.msra.mxu0 0.0
    %397 = vmatprep.subr.mxu0 0.0
    %398 = vmatpush1.msra.mxu0 0.0
    %399 = vmatprep.subr.mxu0 0.0
    %400 = vmatpush1.msra.mxu0 0.0
    %401 = vmatprep.subr.mxu0 0.0
    %402 = vmatpush1.msra.mxu0 0.0
    %403 = vmatprep.subr.mxu0 0.0
    %404 = vmatpush1.msra.mxu0 0.0
    %405 = vmatprep.mubr.f32.mxu0 0.0
    %406 = vmatmul.mubr.f32.gmra.mrb[0].mxu0 %v339
    %v407 = vpop.f32.mrb[0].mxu0
    %v408 = vadd.f32 0.0, %v407
    %v409 = vpop.f32.mrb[0].mxu0
    %v410 = vadd.f32 0.0, %v409
    %411 = vdwg.mxu0
    %v414 = vrot.slane %v408, 6
    %v415 = vrot.slane %v410, 6
    %v418 = vadd.f32 %v195, %v414
    %v419 = vadd.f32 %v197, %v415
    %v420 = vxor.u32 %v418, 2147483648
    %v421 = vxor.u32 %v419, 2147483648
    %v422 = vmul.f32 %v420, 1.442695
    %v423 = vpow.pop %v422
    %v424 = vmul.f32 %v421, 1.442695
    %v425 = vpow.pop %v424
    %v426 = vadd.f32 %v423, 1.0
    %v427 = vadd.f32 %v425, 1.0
    %v428 = vrcp.pop %v426
    %v429 = vmul.f32 1.0, %v428
    %v430 = vrcp.pop %v427
    %v431 = vmul.f32 1.0, %v430
    %v432 = vmul.f32 %v429, %v230
    %v433 = vmul.f32 %v431, %v231
    %v434 = vadd.f32 %v432, %v232
    %v435 = vadd.f32 %v433, %v233
    %v437 = vrot.slane %v333, 6
    %v439 = vmul.f32 %v434, %v437
    %v440 = vmul.f32 %v434, %v435
    %442 = vrot.lane.b32.xlu0 %v440, 64
    %v443 = vpop.permute.xlu0 %442
    %v445 = vadd.f32 %v439, %v443
    %v446 = vtanh.pop %v445
    %v447 = vmul.f32 %v435, %v446
    %v449 = vrot.slane %v447, 2
    %450 = vrot.lane.b32.xlu0 %v449, 64
    %v451 = vpop.permute.xlu0 %450
    %v452 = vsel %vm234, %v451, 0
    %454 = vmatprep.subr.mxu0 %v206
    %455 = vmatpush1.msra.mxu0 %v205
    %456 = vmatprep.subr.mxu0 %v208
    %457 = vmatpush1.msra.mxu0 %v207
    %458 = vmatprep.subr.mxu0 %v210
    %459 = vmatpush1.msra.mxu0 %v209
    %460 = vmatprep.subr.mxu0 %v212
    %461 = vmatpush1.msra.mxu0 %v211
    %462 = vmatprep.subr.mxu0 %v214
    %463 = vmatpush1.msra.mxu0 %v213
    %464 = vmatprep.subr.mxu0 %v216
    %465 = vmatpush1.msra.mxu0 %v215
    %466 = vmatprep.subr.mxu0 %v218
    %467 = vmatpush1.msra.mxu0 %v217
    %468 = vmatprep.subr.mxu0 %v220
    %469 = vmatpush1.msra.mxu0 %v219
    %470 = vmatprep.subr.mxu0 0.0
    %471 = vmatpush1.msra.mxu0 0.0
    %472 = vmatprep.subr.mxu0 0.0
    %473 = vmatpush1.msra.mxu0 0.0
    %474 = vmatprep.subr.mxu0 0.0
    %475 = vmatpush1.msra.mxu0 0.0
    %476 = vmatprep.subr.mxu0 0.0
    %477 = vmatpush1.msra.mxu0 0.0
    %478 = vmatprep.subr.mxu0 0.0
    %479 = vmatpush1.msra.mxu0 0.0
    %480 = vmatprep.subr.mxu0 0.0
    %481 = vmatpush1.msra.mxu0 0.0
    %482 = vmatprep.subr.mxu0 0.0
    %483 = vmatpush1.msra.mxu0 0.0
    %484 = vmatprep.subr.mxu0 0.0
    %485 = vmatpush1.msra.mxu0 0.0
    %486 = vmatprep.subr.mxu0 0.0
    %487 = vmatpush1.msra.mxu0 0.0
    %488 = vmatprep.subr.mxu0 0.0
    %489 = vmatpush1.msra.mxu0 0.0
    %490 = vmatprep.subr.mxu0 0.0
    %491 = vmatpush1.msra.mxu0 0.0
    %492 = vmatprep.subr.mxu0 0.0
    %493 = vmatpush1.msra.mxu0 0.0
    %494 = vmatprep.subr.mxu0 0.0
    %495 = vmatpush1.msra.mxu0 0.0
    %496 = vmatprep.subr.mxu0 0.0
    %497 = vmatpush1.msra.mxu0 0.0
    %498 = vmatprep.subr.mxu0 0.0
    %499 = vmatpush1.msra.mxu0 0.0
    %500 = vmatprep.subr.mxu0 0.0
    %501 = vmatpush1.msra.mxu0 0.0
    %502 = vmatprep.subr.mxu0 0.0
    %503 = vmatpush1.msra.mxu0 0.0
    %504 = vmatprep.subr.mxu0 0.0
    %505 = vmatpush1.msra.mxu0 0.0
    %506 = vmatprep.subr.mxu0 0.0
    %507 = vmatpush1.msra.mxu0 0.0
    %508 = vmatprep.subr.mxu0 0.0
    %509 = vmatpush1.msra.mxu0 0.0
    %510 = vmatprep.subr.mxu0 0.0
    %511 = vmatpush1.msra.mxu0 0.0
    %512 = vmatprep.subr.mxu0 0.0
    %513 = vmatpush1.msra.mxu0 0.0
    %514 = vmatprep.subr.mxu0 0.0
    %515 = vmatpush1.msra.mxu0 0.0
    %516 = vmatprep.subr.mxu0 0.0
    %517 = vmatpush1.msra.mxu0 0.0
    %518 = vmatprep.mubr.f32.mxu0 0.0
    %519 = vmatmul.mubr.f32.gmra.mrb[0].mxu0 %v452
    %v520 = vpop.f32.mrb[0].mxu0
    %v521 = vadd.f32 0.0, %v520
    %v522 = vpop.f32.mrb[0].mxu0
    %v523 = vadd.f32 0.0, %v522
    %524 = vdwg.mxu0
    %v527 = vrot.slane %v521, 4
    %v528 = vrot.slane %v523, 4
    %v531 = vadd.f32 %v195, %v527
    %v532 = vadd.f32 %v197, %v528
    %v533 = vxor.u32 %v531, 2147483648
    %v534 = vxor.u32 %v532, 2147483648
    %v535 = vmul.f32 %v533, 1.442695
    %v536 = vpow.pop %v535
    %v537 = vmul.f32 %v534, 1.442695
    %v538 = vpow.pop %v537
    %v539 = vadd.f32 %v536, 1.0
    %v540 = vadd.f32 %v538, 1.0
    %v541 = vrcp.pop %v539
    %v542 = vmul.f32 1.0, %v541
    %v543 = vrcp.pop %v540
    %v544 = vmul.f32 1.0, %v543
    %v545 = vmul.f32 %v542, %v230
    %v546 = vmul.f32 %v544, %v231
    %v547 = vadd.f32 %v545, %v232
    %v548 = vadd.f32 %v546, %v233
    %v550 = vrot.slane %v445, 6
    %v552 = vmul.f32 %v547, %v550
    %v553 = vmul.f32 %v547, %v548
    %555 = vrot.lane.b32.xlu0 %v553, 64
    %v556 = vpop.permute.xlu0 %555
    %v558 = vadd.f32 %v552, %v556
    %v559 = vtanh.pop %v558
    %v560 = vmul.f32 %v548, %v559
    %v562 = vrot.slane %v560, 4
    %563 = vrot.lane.b32.xlu0 %v562, 64
    %v564 = vpop.permute.xlu0 %563
    %v565 = vsel %vm234, %v564, 0
    %567 = vmatprep.subr.mxu0 %v206
    %568 = vmatpush1.msra.mxu0 %v205
    %569 = vmatprep.subr.mxu0 %v208
    %570 = vmatpush1.msra.mxu0 %v207
    %571 = vmatprep.subr.mxu0 %v210
    %572 = vmatpush1.msra.mxu0 %v209
    %573 = vmatprep.subr.mxu0 %v212
    %574 = vmatpush1.msra.mxu0 %v211
    %575 = vmatprep.subr.mxu0 %v214
    %576 = vmatpush1.msra.mxu0 %v213
    %577 = vmatprep.subr.mxu0 %v216
    %578 = vmatpush1.msra.mxu0 %v215
    %579 = vmatprep.subr.mxu0 %v218
    %580 = vmatpush1.msra.mxu0 %v217
    %581 = vmatprep.subr.mxu0 %v220
    %582 = vmatpush1.msra.mxu0 %v219
    %583 = vmatprep.subr.mxu0 0.0
    %584 = vmatpush1.msra.mxu0 0.0
    %585 = vmatprep.subr.mxu0 0.0
    %586 = vmatpush1.msra.mxu0 0.0
    %587 = vmatprep.subr.mxu0 0.0
    %588 = vmatpush1.msra.mxu0 0.0
    %589 = vmatprep.subr.mxu0 0.0
    %590 = vmatpush1.msra.mxu0 0.0
    %591 = vmatprep.subr.mxu0 0.0
    %592 = vmatpush1.msra.mxu0 0.0
    %593 = vmatprep.subr.mxu0 0.0
    %594 = vmatpush1.msra.mxu0 0.0
    %595 = vmatprep.subr.mxu0 0.0
    %596 = vmatpush1.msra.mxu0 0.0
    %597 = vmatprep.subr.mxu0 0.0
    %598 = vmatpush1.msra.mxu0 0.0
    %599 = vmatprep.subr.mxu0 0.0
    %600 = vmatpush1.msra.mxu0 0.0
    %601 = vmatprep.subr.mxu0 0.0
    %602 = vmatpush1.msra.mxu0 0.0
    %603 = vmatprep.subr.mxu0 0.0
    %604 = vmatpush1.msra.mxu0 0.0
    %605 = vmatprep.subr.mxu0 0.0
    %606 = vmatpush1.msra.mxu0 0.0
    %607 = vmatprep.subr.mxu0 0.0
    %608 = vmatpush1.msra.mxu0 0.0
    %609 = vmatprep.subr.mxu0 0.0
    %610 = vmatpush1.msra.mxu0 0.0
    %611 = vmatprep.subr.mxu0 0.0
    %612 = vmatpush1.msra.mxu0 0.0
    %613 = vmatprep.subr.mxu0 0.0
    %614 = vmatpush1.msra.mxu0 0.0
    %615 = vmatprep.subr.mxu0 0.0
    %616 = vmatpush1.msra.mxu0 0.0
    %617 = vmatprep.subr.mxu0 0.0
    %618 = vmatpush1.msra.mxu0 0.0
    %619 = vmatprep.subr.mxu0 0.0
    %620 = vmatpush1.msra.mxu0 0.0
    %621 = vmatprep.subr.mxu0 0.0
    %622 = vmatpush1.msra.mxu0 0.0
    %623 = vmatprep.subr.mxu0 0.0
    %624 = vmatpush1.msra.mxu0 0.0
    %625 = vmatprep.subr.mxu0 0.0
    %626 = vmatpush1.msra.mxu0 0.0
    %627 = vmatprep.subr.mxu0 0.0
    %628 = vmatpush1.msra.mxu0 0.0
    %629 = vmatprep.subr.mxu0 0.0
    %630 = vmatpush1.msra.mxu0 0.0
    %631 = vmatprep.mubr.f32.mxu0 0.0
    %632 = vmatmul.mubr.f32.gmra.mrb[0].mxu0 %v565
    %v633 = vpop.f32.mrb[0].mxu0
    %v634 = vadd.f32 0.0, %v633
    %v635 = vpop.f32.mrb[0].mxu0
    %v636 = vadd.f32 0.0, %v635
    %637 = vdwg.mxu0
    %v640 = vrot.slane %v634, 2
    %v641 = vrot.slane %v636, 2
    %v644 = vadd.f32 %v195, %v640
    %v645 = vadd.f32 %v197, %v641
    %v646 = vxor.u32 %v644, 2147483648
    %v647 = vxor.u32 %v645, 2147483648
    %v648 = vmul.f32 %v646, 1.442695
    %v649 = vpow.pop %v648
    %v650 = vmul.f32 %v647, 1.442695
    %v651 = vpow.pop %v650
    %v652 = vadd.f32 %v649, 1.0
    %v653 = vadd.f32 %v651, 1.0
    %v654 = vrcp.pop %v652
    %v655 = vmul.f32 1.0, %v654
    %v656 = vrcp.pop %v653
    %v657 = vmul.f32 1.0, %v656
    %v658 = vmul.f32 %v655, %v230
    %v659 = vmul.f32 %v657, %v231
    %v660 = vadd.f32 %v658, %v232
    %v661 = vadd.f32 %v659, %v233
    %v663 = vrot.slane %v558, 6
    %v665 = vmul.f32 %v660, %v663
    %v666 = vmul.f32 %v660, %v661
    %668 = vrot.lane.b32.xlu0 %v666, 64
    %v669 = vpop.permute.xlu0 %668
    %v671 = vadd.f32 %v665, %v669
    %v672 = vtanh.pop %v671
    %v673 = vmul.f32 %v661, %v672
    %v675 = vrot.slane %v673, 6
    %676 = vrot.lane.b32.xlu0 %v675, 64
    %v677 = vpop.permute.xlu0 %676
    %v678 = vsel %vm234, %v677, 0
    %680 = vmatprep.subr.mxu0 %v206
    %681 = vmatpush1.msra.mxu0 %v205
    %682 = vmatprep.subr.mxu0 %v208
    %683 = vmatpush1.msra.mxu0 %v207
    %684 = vmatprep.subr.mxu0 %v210
    %685 = vmatpush1.msra.mxu0 %v209
    %686 = vmatprep.subr.mxu0 %v212
    %687 = vmatpush1.msra.mxu0 %v211
    %688 = vmatprep.subr.mxu0 %v214
    %689 = vmatpush1.msra.mxu0 %v213
    %690 = vmatprep.subr.mxu0 %v216
    %691 = vmatpush1.msra.mxu0 %v215
    %692 = vmatprep.subr.mxu0 %v218
    %693 = vmatpush1.msra.mxu0 %v217
    %694 = vmatprep.subr.mxu0 %v220
    %695 = vmatpush1.msra.mxu0 %v219
    %696 = vmatprep.subr.mxu0 0.0
    %697 = vmatpush1.msra.mxu0 0.0
    %698 = vmatprep.subr.mxu0 0.0
    %699 = vmatpush1.msra.mxu0 0.0
    %700 = vmatprep.subr.mxu0 0.0
    %701 = vmatpush1.msra.mxu0 0.0
    %702 = vmatprep.subr.mxu0 0.0
    %703 = vmatpush1.msra.mxu0 0.0
    %704 = vmatprep.subr.mxu0 0.0
    %705 = vmatpush1.msra.mxu0 0.0
    %706 = vmatprep.subr.mxu0 0.0
    %707 = vmatpush1.msra.mxu0 0.0
    %708 = vmatprep.subr.mxu0 0.0
    %709 = vmatpush1.msra.mxu0 0.0
    %710 = vmatprep.subr.mxu0 0.0
    %711 = vmatpush1.msra.mxu0 0.0
    %712 = vmatprep.subr.mxu0 0.0
    %713 = vmatpush1.msra.mxu0 0.0
    %714 = vmatprep.subr.mxu0 0.0
    %715 = vmatpush1.msra.mxu0 0.0
    %716 = vmatprep.subr.mxu0 0.0
    %717 = vmatpush1.msra.mxu0 0.0
    %718 = vmatprep.subr.mxu0 0.0
    %719 = vmatpush1.msra.mxu0 0.0
    %720 = vmatprep.subr.mxu0 0.0
    %721 = vmatpush1.msra.mxu0 0.0
    %722 = vmatprep.subr.mxu0 0.0
    %723 = vmatpush1.msra.mxu0 0.0
    %724 = vmatprep.subr.mxu0 0.0
    %725 = vmatpush1.msra.mxu0 0.0
    %726 = vmatprep.subr.mxu0 0.0
    %727 = vmatpush1.msra.mxu0 0.0
    %728 = vmatprep.subr.mxu0 0.0
    %729 = vmatpush1.msra.mxu0 0.0
    %730 = vmatprep.subr.mxu0 0.0
    %731 = vmatpush1.msra.mxu0 0.0
    %732 = vmatprep.subr.mxu0 0.0
    %733 = vmatpush1.msra.mxu0 0.0
    %734 = vmatprep.subr.mxu0 0.0
    %735 = vmatpush1.msra.mxu0 0.0
    %736 = vmatprep.subr.mxu0 0.0
    %737 = vmatpush1.msra.mxu0 0.0
    %738 = vmatprep.subr.mxu0 0.0
    %739 = vmatpush1.msra.mxu0 0.0
    %740 = vmatprep.subr.mxu0 0.0
    %741 = vmatpush1.msra.mxu0 0.0
    %742 = vmatprep.subr.mxu0 0.0
    %743 = vmatpush1.msra.mxu0 0.0
    %744 = vmatprep.mubr.f32.mxu0 0.0
    %745 = vmatmul.mubr.f32.gmra.mrb[0].mxu0 %v678
    %v746 = vpop.f32.mrb[0].mxu0
    %v747 = vadd.f32 0.0, %v746
    %v748 = vpop.f32.mrb[0].mxu0
    %v749 = vadd.f32 0.0, %v748
    %750 = vdwg.mxu0
    %v751 = vadd.f32 %v201, %v747
    %v752 = vadd.f32 %v203, %v749
    %v753 = vxor.u32 %v751, 2147483648
    %v754 = vxor.u32 %v752, 2147483648
    %v755 = vmul.f32 %v753, 1.442695
    %v756 = vpow.pop %v755
    %v757 = vmul.f32 %v754, 1.442695
    %v758 = vpow.pop %v757
    %v759 = vadd.f32 %v756, 1.0
    %v760 = vadd.f32 %v758, 1.0
    %v761 = vrcp.pop %v759
    %v762 = vmul.f32 1.0, %v761
    %v763 = vrcp.pop %v760
    %v764 = vmul.f32 1.0, %v763
    %v765 = vmul.f32 %v762, %v230
    %v766 = vmul.f32 %v764, %v231
    %v767 = vadd.f32 %v765, %v232
    %v768 = vadd.f32 %v766, %v233
    %v770 = vrot.slane %v671, 6
    %v772 = vmul.f32 %v767, %v770
    %v773 = vmul.f32 %v767, %v768
    %775 = vrot.lane.b32.xlu0 %v773, 64
    %v776 = vpop.permute.xlu0 %775
    %v778 = vadd.f32 %v772, %v776
    %v779 = vtanh.pop %v778
    %v780 = vmul.f32 %v768, %v779
    %782 = vrot.lane.b32.xlu0 %v780, 64
    %v783 = vpop.permute.xlu0 %782
    %v784 = vsel %vm234, %v783, 0
    %786 = vmatprep.subr.mxu0 %v206
    %787 = vmatpush1.msra.mxu0 %v205
    %788 = vmatprep.subr.mxu0 %v208
    %789 = vmatpush1.msra.mxu0 %v207
    %790 = vmatprep.subr.mxu0 %v210
    %791 = vmatpush1.msra.mxu0 %v209
    %792 = vmatprep.subr.mxu0 %v212
    %793 = vmatpush1.msra.mxu0 %v211
    %794 = vmatprep.subr.mxu0 %v214
    %795 = vmatpush1.msra.mxu0 %v213
    %796 = vmatprep.subr.mxu0 %v216
    %797 = vmatpush1.msra.mxu0 %v215
    %798 = vmatprep.subr.mxu0 %v218
    %799 = vmatpush1.msra.mxu0 %v217
    %800 = vmatprep.subr.mxu0 %v220
    %801 = vmatpush1.msra.mxu0 %v219
    %802 = vmatprep.subr.mxu0 0.0
    %803 = vmatpush1.msra.mxu0 0.0
    %804 = vmatprep.subr.mxu0 0.0
    %805 = vmatpush1.msra.mxu0 0.0
    %806 = vmatprep.subr.mxu0 0.0
    %807 = vmatpush1.msra.mxu0 0.0
    %808 = vmatprep.subr.mxu0 0.0
    %809 = vmatpush1.msra.mxu0 0.0
    %810 = vmatprep.subr.mxu0 0.0
    %811 = vmatpush1.msra.mxu0 0.0
    %812 = vmatprep.subr.mxu0 0.0
    %813 = vmatpush1.msra.mxu0 0.0
    %814 = vmatprep.subr.mxu0 0.0
    %815 = vmatpush1.msra.mxu0 0.0
    %816 = vmatprep.subr.mxu0 0.0
    %817 = vmatpush1.msra.mxu0 0.0
    %818 = vmatprep.subr.mxu0 0.0
    %819 = vmatpush1.msra.mxu0 0.0
    %820 = vmatprep.subr.mxu0 0.0
    %821 = vmatpush1.msra.mxu0 0.0
    %822 = vmatprep.subr.mxu0 0.0
    %823 = vmatpush1.msra.mxu0 0.0
    %824 = vmatprep.subr.mxu0 0.0
    %825 = vmatpush1.msra.mxu0 0.0
    %826 = vmatprep.subr.mxu0 0.0
    %827 = vmatpush1.msra.mxu0 0.0
    %828 = vmatprep.subr.mxu0 0.0
    %829 = vmatpush1.msra.mxu0 0.0
    %830 = vmatprep.subr.mxu0 0.0
    %831 = vmatpush1.msra.mxu0 0.0
    %832 = vmatprep.subr.mxu0 0.0
    %833 = vmatpush1.msra.mxu0 0.0
    %834 = vmatprep.subr.mxu0 0.0
    %835 = vmatpush1.msra.mxu0 0.0
    %836 = vmatprep.subr.mxu0 0.0
    %837 = vmatpush1.msra.mxu0 0.0
    %838 = vmatprep.subr.mxu0 0.0
    %839 = vmatpush1.msra.mxu0 0.0
    %840 = vmatprep.subr.mxu0 0.0
    %841 = vmatpush1.msra.mxu0 0.0
    %842 = vmatprep.subr.mxu0 0.0
    %843 = vmatpush1.msra.mxu0 0.0
    %844 = vmatprep.subr.mxu0 0.0
    %845 = vmatpush1.msra.mxu0 0.0
    %846 = vmatprep.subr.mxu0 0.0
    %847 = vmatpush1.msra.mxu0 0.0
    %848 = vmatprep.subr.mxu0 0.0
    %849 = vmatpush1.msra.mxu0 0.0
    %850 = vmatprep.mubr.f32.mxu0 0.0
    %851 = vmatmul.mubr.f32.gmra.mrb[0].mxu0 %v784
    %v852 = vpop.f32.mrb[0].mxu0
    %v853 = vadd.f32 0.0, %v852
    %v854 = vpop.f32.mrb[0].mxu0
    %v855 = vadd.f32 0.0, %v854
    %856 = vdwg.mxu0
    %v859 = vrot.slane %v853, 6
    %v860 = vrot.slane %v855, 6
    %v863 = vadd.f32 %v201, %v859
    %v864 = vadd.f32 %v203, %v860
    %v865 = vxor.u32 %v863, 2147483648
    %v866 = vxor.u32 %v864, 2147483648
    %v867 = vmul.f32 %v865, 1.442695
    %v868 = vpow.pop %v867
    %v869 = vmul.f32 %v866, 1.442695
    %v870 = vpow.pop %v869
    %v871 = vadd.f32 %v868, 1.0
    %v872 = vadd.f32 %v870, 1.0
    %v873 = vrcp.pop %v871
    %v874 = vmul.f32 1.0, %v873
    %v875 = vrcp.pop %v872
    %v876 = vmul.f32 1.0, %v875
    %v877 = vmul.f32 %v874, %v230
    %v878 = vmul.f32 %v876, %v231
    %v879 = vadd.f32 %v877, %v232
    %v880 = vadd.f32 %v878, %v233
    %v882 = vrot.slane %v778, 6
    %v884 = vmul.f32 %v879, %v882
    %v885 = vmul.f32 %v879, %v880
    %887 = vrot.lane.b32.xlu0 %v885, 64
    %v888 = vpop.permute.xlu0 %887
    %v890 = vadd.f32 %v884, %v888
    %v891 = vtanh.pop %v890
    %v892 = vmul.f32 %v880, %v891
    %v894 = vrot.slane %v892, 2
    %895 = vrot.lane.b32.xlu0 %v894, 64
    %v896 = vpop.permute.xlu0 %895
    %v897 = vsel %vm234, %v896, 0
    %899 = vmatprep.subr.mxu0 %v206
    %900 = vmatpush1.msra.mxu0 %v205
    %901 = vmatprep.subr.mxu0 %v208
    %902 = vmatpush1.msra.mxu0 %v207
    %903 = vmatprep.subr.mxu0 %v210
    %904 = vmatpush1.msra.mxu0 %v209
    %905 = vmatprep.subr.mxu0 %v212
    %906 = vmatpush1.msra.mxu0 %v211
    %907 = vmatprep.subr.mxu0 %v214
    %908 = vmatpush1.msra.mxu0 %v213
    %909 = vmatprep.subr.mxu0 %v216
    %910 = vmatpush1.msra.mxu0 %v215
    %911 = vmatprep.subr.mxu0 %v218
    %912 = vmatpush1.msra.mxu0 %v217
    %913 = vmatprep.subr.mxu0 %v220
    %914 = vmatpush1.msra.mxu0 %v219
    %915 = vmatprep.subr.mxu0 0.0
    %916 = vmatpush1.msra.mxu0 0.0
    %917 = vmatprep.subr.mxu0 0.0
    %918 = vmatpush1.msra.mxu0 0.0
    %919 = vmatprep.subr.mxu0 0.0
    %920 = vmatpush1.msra.mxu0 0.0
    %921 = vmatprep.subr.mxu0 0.0
    %922 = vmatpush1.msra.mxu0 0.0
    %923 = vmatprep.subr.mxu0 0.0
    %924 = vmatpush1.msra.mxu0 0.0
    %925 = vmatprep.subr.mxu0 0.0
    %926 = vmatpush1.msra.mxu0 0.0
    %927 = vmatprep.subr.mxu0 0.0
    %928 = vmatpush1.msra.mxu0 0.0
    %929 = vmatprep.subr.mxu0 0.0
    %930 = vmatpush1.msra.mxu0 0.0
    %931 = vmatprep.subr.mxu0 0.0
    %932 = vmatpush1.msra.mxu0 0.0
    %933 = vmatprep.subr.mxu0 0.0
    %934 = vmatpush1.msra.mxu0 0.0
    %935 = vmatprep.subr.mxu0 0.0
    %936 = vmatpush1.msra.mxu0 0.0
    %937 = vmatprep.subr.mxu0 0.0
    %938 = vmatpush1.msra.mxu0 0.0
    %939 = vmatprep.subr.mxu0 0.0
    %940 = vmatpush1.msra.mxu0 0.0
    %941 = vmatprep.subr.mxu0 0.0
    %942 = vmatpush1.msra.mxu0 0.0
    %943 = vmatprep.subr.mxu0 0.0
    %944 = vmatpush1.msra.mxu0 0.0
    %945 = vmatprep.subr.mxu0 0.0
    %946 = vmatpush1.msra.mxu0 0.0
    %947 = vmatprep.subr.mxu0 0.0
    %948 = vmatpush1.msra.mxu0 0.0
    %949 = vmatprep.subr.mxu0 0.0
    %950 = vmatpush1.msra.mxu0 0.0
    %951 = vmatprep.subr.mxu0 0.0
    %952 = vmatpush1.msra.mxu0 0.0
    %953 = vmatprep.subr.mxu0 0.0
    %954 = vmatpush1.msra.mxu0 0.0
    %955 = vmatprep.subr.mxu0 0.0
    %956 = vmatpush1.msra.mxu0 0.0
    %957 = vmatprep.subr.mxu0 0.0
    %958 = vmatpush1.msra.mxu0 0.0
    %959 = vmatprep.subr.mxu0 0.0
    %960 = vmatpush1.msra.mxu0 0.0
    %961 = vmatprep.subr.mxu0 0.0
    %962 = vmatpush1.msra.mxu0 0.0
    %963 = vmatprep.mubr.f32.mxu0 0.0
    %964 = vmatmul.mubr.f32.gmra.mrb[0].mxu0 %v897
    %v965 = vpop.f32.mrb[0].mxu0
    %v966 = vadd.f32 0.0, %v965
    %v967 = vpop.f32.mrb[0].mxu0
    %v968 = vadd.f32 0.0, %v967
    %969 = vdwg.mxu0
    %v972 = vrot.slane %v966, 4
    %v973 = vrot.slane %v968, 4
    %v976 = vadd.f32 %v201, %v972
    %v977 = vadd.f32 %v203, %v973
    %v978 = vxor.u32 %v976, 2147483648
    %v979 = vxor.u32 %v977, 2147483648
    %v980 = vmul.f32 %v978, 1.442695
    %v981 = vpow.pop %v980
    %v982 = vmul.f32 %v979, 1.442695
    %v983 = vpow.pop %v982
    %v984 = vadd.f32 %v981, 1.0
    %v985 = vadd.f32 %v983, 1.0
    %v986 = vrcp.pop %v984
    %v987 = vmul.f32 1.0, %v986
    %v988 = vrcp.pop %v985
    %v989 = vmul.f32 1.0, %v988
    %v990 = vmul.f32 %v987, %v230
    %v991 = vmul.f32 %v989, %v231
    %v992 = vadd.f32 %v990, %v232
    %v993 = vadd.f32 %v991, %v233
    %v995 = vrot.slane %v890, 6
    %v997 = vmul.f32 %v992, %v995
    %v998 = vmul.f32 %v992, %v993
    %1000 = vrot.lane.b32.xlu0 %v998, 64
    %v1001 = vpop.permute.xlu0 %1000
    %v1003 = vadd.f32 %v997, %v1001
    %v1004 = vtanh.pop %v1003
    %v1005 = vmul.f32 %v993, %v1004
    %v1007 = vrot.slane %v1005, 4
    %1008 = vrot.lane.b32.xlu0 %v1007, 64
    %v1009 = vpop.permute.xlu0 %1008
    %v1010 = vsel %vm234, %v1009, 0
    %1012 = vmatprep.subr.mxu0 %v206
    %1013 = vmatpush1.msra.mxu0 %v205
    %1014 = vmatprep.subr.mxu0 %v208
    %1015 = vmatpush1.msra.mxu0 %v207
    %1016 = vmatprep.subr.mxu0 %v210
    %1017 = vmatpush1.msra.mxu0 %v209
    %1018 = vmatprep.subr.mxu0 %v212
    %1019 = vmatpush1.msra.mxu0 %v211
    %1020 = vmatprep.subr.mxu0 %v214
    %1021 = vmatpush1.msra.mxu0 %v213
    %1022 = vmatprep.subr.mxu0 %v216
    %1023 = vmatpush1.msra.mxu0 %v215
    %1024 = vmatprep.subr.mxu0 %v218
    %1025 = vmatpush1.msra.mxu0 %v217
    %1026 = vmatprep.subr.mxu0 %v220
    %1027 = vmatpush1.msra.mxu0 %v219
    %1028 = vmatprep.subr.mxu0 0.0
    %1029 = vmatpush1.msra.mxu0 0.0
    %1030 = vmatprep.subr.mxu0 0.0
    %1031 = vmatpush1.msra.mxu0 0.0
    %1032 = vmatprep.subr.mxu0 0.0
    %1033 = vmatpush1.msra.mxu0 0.0
    %1034 = vmatprep.subr.mxu0 0.0
    %1035 = vmatpush1.msra.mxu0 0.0
    %1036 = vmatprep.subr.mxu0 0.0
    %1037 = vmatpush1.msra.mxu0 0.0
    %1038 = vmatprep.subr.mxu0 0.0
    %1039 = vmatpush1.msra.mxu0 0.0
    %1040 = vmatprep.subr.mxu0 0.0
    %1041 = vmatpush1.msra.mxu0 0.0
    %1042 = vmatprep.subr.mxu0 0.0
    %1043 = vmatpush1.msra.mxu0 0.0
    %1044 = vmatprep.subr.mxu0 0.0
    %1045 = vmatpush1.msra.mxu0 0.0
    %1046 = vmatprep.subr.mxu0 0.0
    %1047 = vmatpush1.msra.mxu0 0.0
    %1048 = vmatprep.subr.mxu0 0.0
    %1049 = vmatpush1.msra.mxu0 0.0
    %1050 = vmatprep.subr.mxu0 0.0
    %1051 = vmatpush1.msra.mxu0 0.0
    %1052 = vmatprep.subr.mxu0 0.0
    %1053 = vmatpush1.msra.mxu0 0.0
    %1054 = vmatprep.subr.mxu0 0.0
    %1055 = vmatpush1.msra.mxu0 0.0
    %1056 = vmatprep.subr.mxu0 0.0
    %1057 = vmatpush1.msra.mxu0 0.0
    %1058 = vmatprep.subr.mxu0 0.0
    %1059 = vmatpush1.msra.mxu0 0.0
    %1060 = vmatprep.subr.mxu0 0.0
    %1061 = vmatpush1.msra.mxu0 0.0
    %1062 = vmatprep.subr.mxu0 0.0
    %1063 = vmatpush1.msra.mxu0 0.0
    %1064 = vmatprep.subr.mxu0 0.0
    %1065 = vmatpush1.msra.mxu0 0.0
    %1066 = vmatprep.subr.mxu0 0.0
    %1067 = vmatpush1.msra.mxu0 0.0
    %1068 = vmatprep.subr.mxu0 0.0
    %1069 = vmatpush1.msra.mxu0 0.0
    %1070 = vmatprep.subr.mxu0 0.0
    %1071 = vmatpush1.msra.mxu0 0.0
    %1072 = vmatprep.subr.mxu0 0.0
    %1073 = vmatpush1.msra.mxu0 0.0
    %1074 = vmatprep.subr.mxu0 0.0
    %1075 = vmatpush1.msra.mxu0 0.0
    %1076 = vmatprep.mubr.f32.mxu0 0.0
    %1077 = vmatmul.mubr.f32.gmra.mrb[0].mxu0 %v1010
    %v1078 = vpop.f32.mrb[0].mxu0
    %v1079 = vadd.f32 0.0, %v1078
    %v1080 = vpop.f32.mrb[0].mxu0
    %v1081 = vadd.f32 0.0, %v1080
    %1082 = vdwg.mxu0
    %v1085 = vrot.slane %v1079, 2
    %v1086 = vrot.slane %v1081, 2
    %v1089 = vadd.f32 %v201, %v1085
    %v1090 = vadd.f32 %v203, %v1086
    %v1091 = vxor.u32 %v1089, 2147483648
    %v1092 = vxor.u32 %v1090, 2147483648
    %v1093 = vmul.f32 %v1091, 1.442695
    %v1094 = vpow.pop %v1093
    %v1095 = vmul.f32 %v1092, 1.442695
    %v1096 = vpow.pop %v1095
    %v1097 = vadd.f32 %v1094, 1.0
    %v1098 = vadd.f32 %v1096, 1.0
    %v1099 = vrcp.pop %v1097
    %v1100 = vmul.f32 1.0, %v1099
    %v1101 = vrcp.pop %v1098
    %v1102 = vmul.f32 1.0, %v1101
    %v1103 = vmul.f32 %v1100, %v230
    %v1104 = vmul.f32 %v1102, %v231
    %v1105 = vadd.f32 %v1103, %v232
    %v1106 = vadd.f32 %v1104, %v233
    %v1108 = vrot.slane %v1003, 6
    %v1110 = vmul.f32 %v1105, %v1108
    %v1111 = vmul.f32 %v1105, %v1106
    %1113 = vrot.lane.b32.xlu0 %v1111, 64
    %v1114 = vpop.permute.xlu0 %1113
    %v1116 = vadd.f32 %v1110, %v1114
    %v1117 = vtanh.pop %v1116
    %v1118 = vmul.f32 %v1106, %v1117
    %vm1119 = vcmp.lt.s32.totalorder %v222, 32
    %v1122 = vrot.slane %v1118, 6
    %1123 = vrot.lane.b32.xlu0 %v1122, 64
    %v1124 = vpop.permute.xlu0 %1123
    %v1126 = vsel %vm1119, %v338, %v1124
    %v1129 = vsel %vm1119, %v451, %v1009
    %v1132 = vsel %vm1119, %v564, %v896
    %v1135 = vsel %vm1119, %v677, %v783
    %v1136 = vsel %vm1119, %v783, %v677
    %v1137 = vsel %vm1119, %v896, %v564
    %v1138 = vsel %vm1119, %v1009, %v451
    %v1139 = vsel %vm1119, %v1124, %v338
    %1140 = vrot.lane.b32.xlu0 %v1118, 64
    %v1141 = vpop.permute.xlu0 %1140
    %v1143 = vrot.slane %v1118, 1
    %1144 = vrot.lane.b32.xlu0 %v1143, 96
    %v1145 = vpop.permute.xlu0 %1144
    %vm1147 = vcmask 261120
    %v1148 = vsel %vm1147, %v1141, %v1145
    %1149 = vrot.lane.b32.xlu0 %v1118, 32
    %v1150 = vpop.permute.xlu0 %1149
    %1152 = vrot.lane.b32.xlu0 %v1143, 64
    %v1153 = vpop.permute.xlu0 %1152
    %v1155 = vsel %vm1147, %v1150, %v1153
    %v1157 = vrot.slane %v1148, 6
    %v1160 = vrot.slane %v1155, 5
    %vm1162 = vcmask 1040384
    %v1163 = vsel %vm1162, %v1157, %v1160
    %v1164 = vmul.f32 %v1126, %v1163
    %vm1165 = vcmask 517120
    %v1166 = vsel %vm1165, %v1164, 0.0
    %1167 = vadd.xlane.f32.xlu0 %v1166
    %v1168 = vpop.xlane.xlu0 %1167
    %v1169 = vmul.f32 %v1129, %v1163
    %v1170 = vsel %vm1165, %v1169, 0.0
    %1171 = vadd.xlane.f32.xlu0 %v1170
    %v1172 = vpop.xlane.xlu0 %1171
    %v1173 = vmul.f32 %v1132, %v1163
    %v1174 = vsel %vm1165, %v1173, 0.0
    %1175 = vadd.xlane.f32.xlu0 %v1174
    %v1176 = vpop.xlane.xlu0 %1175
    %v1177 = vmul.f32 %v1135, %v1163
    %v1178 = vsel %vm1165, %v1177, 0.0
    %1179 = vadd.xlane.f32.xlu0 %v1178
    %v1180 = vpop.xlane.xlu0 %1179
    %v1181 = vmul.f32 %v1136, %v1163
    %v1182 = vsel %vm1165, %v1181, 0.0
    %1183 = vadd.xlane.f32.xlu0 %v1182
    %v1184 = vpop.xlane.xlu0 %1183
    %v1185 = vmul.f32 %v1137, %v1163
    %v1186 = vsel %vm1165, %v1185, 0.0
    %1187 = vadd.xlane.f32.xlu0 %v1186
    %v1188 = vpop.xlane.xlu0 %1187
    %v1189 = vmul.f32 %v1138, %v1163
    %v1190 = vsel %vm1165, %v1189, 0.0
    %1191 = vadd.xlane.f32.xlu0 %v1190
    %v1192 = vpop.xlane.xlu0 %1191
    %v1193 = vmul.f32 %v1139, %v1163
    %v1194 = vsel %vm1165, %v1193, 0.0
    %1195 = vadd.xlane.f32.xlu0 %v1194
    %v1196 = vpop.xlane.xlu0 %1195
    %vm1197 = vcmask 7168
    %v1198 = vsel %vm1197, %v1168, %v1172
    %vm1199 = vcmask 15360
    %v1200 = vsel %vm1199, %v1198, %v1176
    %vm1201 = vcmask 23552
    %v1202 = vsel %vm1201, %v1200, %v1180
    %vm1203 = vcmask 31744
    %v1204 = vsel %vm1203, %v1202, %v1184
    %vm1205 = vcmask 39936
    %v1206 = vsel %vm1205, %v1204, %v1188
    %vm1207 = vcmask 48128
    %v1208 = vsel %vm1207, %v1206, %v1192
    %vm1209 = vcmask 56320
    %v1210 = vsel %vm1209, %v1208, %v1196
    %vm1211 = vcmask 58368
    %v1212 = vsel %vm1211, %v1210, -inf
    %1213 = vmax.xlane.f32.xlu0 %v1212
    %v1214 = vpop.xlane.xlu0 %1213
    %v1215 = vsub.f32 %v1210, %v1214
    %v1216 = vmul.f32 %v1215, 1.442695
    %v1217 = vpow.pop %v1216
    %v1218 = vsel %vm1211, %v1217, 0.0
    %1219 = vadd.xlane.f32.xlu0 %v1218
    %v1220 = vpop.xlane.xlu0 %1219
    %v1221 = vrcp.pop %v1220
    %v1222 = vmul.f32 %v1217, %v1221
    %1224 = vset.pattern.permute.xlu0 0
    %1225 = vperm.xlu0 %1224, %v1222
    %v1226 = vpop.permute.xlu0 %1225
    %v1228 = vmul.f32 %v1126, %v1226
    %1229 = vset.pattern.permute.xlu0 1
    %1230 = vperm.xlu0 %1229, %v1222
    %v1231 = vpop.permute.xlu0 %1230
    %v1233 = vmul.f32 %v1129, %v1231
    %v1234 = vadd.f32 %v1228, %v1233
    %1235 = vset.pattern.permute.xlu0 2
    %1236 = vperm.xlu0 %1235, %v1222
    %v1237 = vpop.permute.xlu0 %1236
    %v1239 = vmul.f32 %v1132, %v1237
    %v1240 = vadd.f32 %v1234, %v1239
    %1241 = vset.pattern.permute.xlu0 3
    %1242 = vperm.xlu0 %1241, %v1222
    %v1243 = vpop.permute.xlu0 %1242
    %v1245 = vmul.f32 %v1135, %v1243
    %v1246 = vadd.f32 %v1240, %v1245
    %1247 = vset.pattern.permute.xlu0 4
    %1248 = vperm.xlu0 %1247, %v1222
    %v1249 = vpop.permute.xlu0 %1248
    %v1251 = vmul.f32 %v1136, %v1249
    %v1252 = vadd.f32 %v1246, %v1251
    %1253 = vset.pattern.permute.xlu0 5
    %1254 = vperm.xlu0 %1253, %v1222
    %v1255 = vpop.permute.xlu0 %1254
    %v1257 = vmul.f32 %v1137, %v1255
    %v1258 = vadd.f32 %v1252, %v1257
    %1259 = vset.pattern.permute.xlu0 6
    %1260 = vperm.xlu0 %1259, %v1222
    %v1261 = vpop.permute.xlu0 %1260
    %v1263 = vmul.f32 %v1138, %v1261
    %v1264 = vadd.f32 %v1258, %v1263
    %1265 = vset.pattern.permute.xlu0 7
    %1266 = vperm.xlu0 %1265, %v1222
    %v1267 = vpop.permute.xlu0 %1266
    %v1269 = vmul.f32 %v1139, %v1267
    %v1270 = vadd.f32 %v1264, %v1269
    %v1271 = vld [vmem:[#allocation8] sm:$0xff]
    %v1272 = vld [vmem:[#allocation8 + $0x8] sm:$0xff]
    %v1273 = vld [vmem:[#allocation8 + $0x10] sm:$0xff]
    %v1274 = vld [vmem:[#allocation8 + $0x18] sm:$0xff]
    %v1275 = vld [vmem:[#allocation8 + $0x20] sm:$0xff]
    %v1276 = vld [vmem:[#allocation8 + $0x28] sm:$0xff]
    %v1277 = vld [vmem:[#allocation8 + $0x30] sm:$0xff]
    %v1278 = vld [vmem:[#allocation8 + $0x38] sm:$0xff]
    %v1279 = vld [vmem:[%s5] sm:$0x1]
    %v1281 = vlaneseq
    %v1282 = vshrl.u32 %v1281, 7
    %v1283 = vsub.s32 0, %v1282
    %v1284 = vrot.slane %v1279, %v1283
    %v1287 = vsel %vm234, %v1270, 0
    %1289 = vmatprep.subr.mxu0 0.0
    %1290 = vmatpush1.msra.mxu0 %v1271
    %1291 = vmatprep.subr.mxu0 0.0
    %1292 = vmatpush1.msra.mxu0 %v1272
    %1293 = vmatprep.subr.mxu0 0.0
    %1294 = vmatpush1.msra.mxu0 %v1273
    %1295 = vmatprep.subr.mxu0 0.0
    %1296 = vmatpush1.msra.mxu0 %v1274
    %1297 = vmatprep.subr.mxu0 0.0
    %1298 = vmatpush1.msra.mxu0 %v1275
    %1299 = vmatprep.subr.mxu0 0.0
    %1300 = vmatpush1.msra.mxu0 %v1276
    %1301 = vmatprep.subr.mxu0 0.0
    %1302 = vmatpush1.msra.mxu0 %v1277
    %1303 = vmatprep.subr.mxu0 0.0
    %1304 = vmatpush1.msra.mxu0 %v1278
    %1305 = vmatprep.subr.mxu0 0.0
    %1306 = vmatpush1.msra.mxu0 0.0
    %1307 = vmatprep.subr.mxu0 0.0
    %1308 = vmatpush1.msra.mxu0 0.0
    %1309 = vmatprep.subr.mxu0 0.0
    %1310 = vmatpush1.msra.mxu0 0.0
    %1311 = vmatprep.subr.mxu0 0.0
    %1312 = vmatpush1.msra.mxu0 0.0
    %1313 = vmatprep.subr.mxu0 0.0
    %1314 = vmatpush1.msra.mxu0 0.0
    %1315 = vmatprep.subr.mxu0 0.0
    %1316 = vmatpush1.msra.mxu0 0.0
    %1317 = vmatprep.subr.mxu0 0.0
    %1318 = vmatpush1.msra.mxu0 0.0
    %1319 = vmatprep.subr.mxu0 0.0
    %1320 = vmatpush1.msra.mxu0 0.0
    %1321 = vmatprep.subr.mxu0 0.0
    %1322 = vmatpush1.msra.mxu0 0.0
    %1323 = vmatprep.subr.mxu0 0.0
    %1324 = vmatpush1.msra.mxu0 0.0
    %1325 = vmatprep.subr.mxu0 0.0
    %1326 = vmatpush1.msra.mxu0 0.0
    %1327 = vmatprep.subr.mxu0 0.0
    %1328 = vmatpush1.msra.mxu0 0.0
    %1329 = vmatprep.subr.mxu0 0.0
    %1330 = vmatpush1.msra.mxu0 0.0
    %1331 = vmatprep.subr.mxu0 0.0
    %1332 = vmatpush1.msra.mxu0 0.0
    %1333 = vmatprep.subr.mxu0 0.0
    %1334 = vmatpush1.msra.mxu0 0.0
    %1335 = vmatprep.subr.mxu0 0.0
    %1336 = vmatpush1.msra.mxu0 0.0
    %1337 = vmatprep.subr.mxu0 0.0
    %1338 = vmatpush1.msra.mxu0 0.0
    %1339 = vmatprep.subr.mxu0 0.0
    %1340 = vmatpush1.msra.mxu0 0.0
    %1341 = vmatprep.subr.mxu0 0.0
    %1342 = vmatpush1.msra.mxu0 0.0
    %1343 = vmatprep.subr.mxu0 0.0
    %1344 = vmatpush1.msra.mxu0 0.0
    %1345 = vmatprep.subr.mxu0 0.0
    %1346 = vmatpush1.msra.mxu0 0.0
    %1347 = vmatprep.subr.mxu0 0.0
    %1348 = vmatpush1.msra.mxu0 0.0
    %1349 = vmatprep.subr.mxu0 0.0
    %1350 = vmatpush1.msra.mxu0 0.0
    %1351 = vmatprep.subr.mxu0 0.0
    %1352 = vmatpush1.msra.mxu0 0.0
    %1353 = vmatprep.mubr.f32.mxu0 0.0
    %1354 = vmatmul.mubr.f32.gmra.mrb[0].mxu0 %v1287
    %v1355 = vpop.f32.mrb[0].mxu0
    %v1356 = vadd.f32 %v1284, %v1355
    %v1357 = vpop.f32.mrb[0].mxu0
    %1358 = vdwg.mxu0
    %1359 = vst [vmem:[#allocation10] sm:$0x3] %v1356
    %vm1360 = vcmask 64512
    %v1361 = vsel %vm1360, %v1222, 0.0
    %1362 = vst [vmem:[#allocation11] sm:$0x3] %v1361
    // Predicated region
    $region42: #{tpu_custom_call.1} parent=1 // pred_check
      _
    $region43: #{tpu_custom_call.1} parent=1 // pred_check_branch
      %1364 = sbr.rel (0) target = $region45
    $region44: #{tpu_custom_call.1} parent=1 // pred_region
      %s1366 = ssub.s32 32, 32
      %1367 = vsyncadd [#allocation4], %s1366
      %s1369 = sshll.u32 [#allocation10], 4
      %s1370 = int_to_ptr.vmem [resolvable:$true] %s1369
      %1372 = dma.vmem_to_hbm [thread:$0]  %s1370, 32, %s6, [#allocation4]
    $region45: #{tpu_custom_call.1} parent=1 // pred_fallthru
      _
    // Predicated region
    $region46: #{tpu_custom_call.1} parent=1 // pred_check
      _
    $region47: #{tpu_custom_call.1} parent=1 // pred_check_branch
      %1374 = sbr.rel (0) target = $region49
    $region48: #{tpu_custom_call.1} parent=1 // pred_region
      %s1376 = ssub.s32 32, 32
      %1377 = vsyncadd [#allocation12], %s1376
      %s1379 = sshll.u32 [#allocation11], 4
      %s1380 = int_to_ptr.vmem [resolvable:$true] %s1379
      %1382 = dma.vmem_to_hbm [thread:$0]  %s1380, 32, %s7, [#allocation12]
    $region49: #{tpu_custom_call.1} parent=1 // pred_fallthru
      _
    // Predicated region
    $region50: #{tpu_custom_call.1} parent=1 // pred_check
      _
    $region51: #{tpu_custom_call.1} parent=1 // pred_check_branch
      %1384 = sbr.rel (0) target = $region53
    $region52: #{tpu_custom_call.1} parent=1 // pred_region
      %1385 = dma.done [#allocation4], 32
    $region53: #{tpu_custom_call.1} parent=1 // pred_fallthru
      _
    // Predicated region
    $region54: #{tpu_custom_call.1} parent=1 // pred_check
      _
    $region55: #{tpu_custom_call.1} parent=1 // pred_check_branch
      %1387 = sbr.rel (0) target = $region57
    $region56: #{tpu_custom_call.1} parent=1 // pred_region
      %1388 = dma.done [#allocation12], 32
    $region57: #{tpu_custom_call.1} parent=1 // pred_fallthru
      _
    %1389 = vsyncpa [#allocation3], 1
    %1390 = vsyncpa [#allocation6], 1
    %1391 = vsyncpa [#allocation9], 1
    %1392 = vsyncpa [#allocation4], 1
    %1393 = vsyncpa [#allocation12], 1

</llo_original>
